<compile_context>
chip_gen: v6e
topology: v6e:2x2x1
jax: 0.10.0
libtpu: 0.0.40
codegen_flags: <defaults>
</compile_context>

<pallas_src>
import functools

import jax
import jax.numpy as jnp
from jax import lax
from jax.experimental import pallas as pl
from jax.experimental.pallas import tpu as pltpu


def gru_kernel(gi_r_ref, gi_z_ref, gi_n_ref, whh_ref, bhh_n_ref,
               fcw_ref, fcb_ref, out_ref, h_scr, *,
               t_chunk, seq_len, mask_tail):
    tc = pl.program_id(1)

    @pl.when(tc == 0)
    def _():
        h_scr[...] = jnp.zeros_like(h_scr)          # h0 = zeros, per batch tile

    # Resident fused hidden-to-hidden weight (H, 3H), column blocks [r | z | n].
    whh = whh_ref[...]                               # bf16
    H = whh.shape[0]
    # Hoisted once per chunk: JAX does not CSE broadcast_in_dim inside the
    # unrolled loop, so do the (TB, H) broadcast of b_hh_n here.
    bhh_n = jnp.broadcast_to(bhh_n_ref[...], h_scr.shape)

    t0 = tc * t_chunk

    def step(t, h):
        # Single wide MXU issue per timestep: bf16 operands, f32 accumulate.
        gh = jnp.dot(h.astype(whh.dtype), whh,
                     preferred_element_type=jnp.float32)        # (TB, 3H) f32
        a_r = gi_r_ref[t].astype(jnp.float32) + gh[:, 0:H]
        a_z = gi_z_ref[t].astype(jnp.float32) + gh[:, H:2 * H]
        h_n = gh[:, 2 * H:3 * H] + bhh_n             # n-gate hidden bias stays inside r*(.)
        r = jax.nn.sigmoid(a_r)
        z = jax.nn.sigmoid(a_z)
        n = jnp.tanh(gi_n_ref[t].astype(jnp.float32) + r * h_n)
        h_new = (1.0 - z) * n + z * h
        if mask_tail:                                # only traced if T was padded
            h_new = jnp.where(t0 + t < seq_len, h_new, h)
        return h_new

    # Partial unroll keeps LLO scheduling visibility without code bloat at big T.
    h = lax.fori_loop(0, t_chunk, step, h_scr[...], unroll=min(t_chunk, 8))
    h_scr[...] = h

    @pl.when(tc == pl.num_programs(1) - 1)
    def _():
        # out[:, -1, :] -> dropout(p=0.2) is identity at inference -> fc.
        # fc output padded to 128 lanes for an unmasked lane-dense store.
        # TODO(synk): training-mode dropout (random mask * 1/0.8) not implemented.
        out_ref[...] = (jnp.dot(h.astype(fcw_ref.dtype), fcw_ref[...],
                                preferred_element_type=jnp.float32)
                        + fcb_ref[...]).astype(out_ref.dtype)


def gru_forward(x, params):
    """x: (B, T, I) float32 (batch_first, like the PyTorch module)."""
    B, T, I = x.shape
    H = params["w_hh"].shape[1]
    C = params["fc_w"].shape[0]
    f32, bf16 = jnp.float32, jnp.bfloat16

    # --- batch tiling: big tiles, but >=2 tiles when B allows (v7x: 2 TCs) ----
    TB = min(128, 8 * pl.cdiv(B, 8))
    if B >= 16 and pl.cdiv(B, TB) < 2:
        TB = max(8, 8 * pl.cdiv(pl.cdiv(B, 2), 8))
    B_pad = TB * pl.cdiv(B, TB)
    nb = B_pad // TB

    # --- time chunking: bounds per-step gi VMEM residency at realistic T ------
    TCHUNK = T if T <= 64 else 64
    Tpad = TCHUNK * pl.cdiv(T, TCHUNK)
    n_tc = Tpad // TCHUNK
    mask_tail = Tpad != T

    if B_pad != B:
        x = jnp.pad(x, ((0, B_pad - B), (0, 0), (0, 0)))

    wih = params["w_ih"].astype(f32)                  # (3H, I), rows = [r | z | n]
    whh = params["w_hh"].astype(f32)                  # (3H, H)
    bih = params["b_ih"].astype(f32)
    bhh = params["b_hh"].astype(f32)

    # Recurrence-free input projection: one explicit transpose to time-major,
    # then a single fused matmul over all three gates (no hidden XLA transposes).
    xt = jnp.transpose(x.astype(f32), (1, 0, 2))      # (T, B_pad, I)
    gi_all = jnp.einsum('tbi,hi->tbh', xt, wih)       # (T, B_pad, 3H)
    bias = bih.at[:2 * H].add(bhh[:2 * H])            # fold b_hh for r/z (recurrence-free)
    gi_all = gi_all + bias

    # Per-gate bf16 streams (kept split while H=32: gate offsets are lane-misaligned).
    gi_r = gi_all[..., 0:H].astype(bf16)
    gi_z = gi_all[..., H:2 * H].astype(bf16)
    gi_n = gi_all[..., 2 * H:3 * H].astype(bf16)
    if mask_tail:
        pad_t = ((0, Tpad - T), (0, 0), (0, 0))
        gi_r = jnp.pad(gi_r, pad_t)
        gi_z = jnp.pad(gi_z, pad_t)
        gi_n = jnp.pad(gi_n, pad_t)

    # Fused hidden-to-hidden weight: whh.T is exactly (H, 3H) with [r|z|n] columns.
    whh_cat = whh.T.astype(bf16)                      # (H, 3H)
    bhh_n = bhh[2 * H:3 * H].reshape(1, H)            # f32, stays inside r*(.)

    # Lane-dense fc head: pad class dim to a multiple of 128.
    Cpad = 128 * pl.cdiv(C, 128)
    fcw = jnp.zeros((H, Cpad), bf16).at[:, :C].set(params["fc_w"].T.astype(bf16))
    fcb = jnp.zeros((1, Cpad), f32).at[:, :C].set(params["fc_b"].astype(f32))

    kernel = functools.partial(gru_kernel, t_chunk=TCHUNK, seq_len=T,
                               mask_tail=mask_tail)

    # NOTE: at realistic H/C the grid-invariant specs below (whh_cat, bhh_n,
    # fcw, fcb) should get pipeline_mode=pl.Buffered(1) to drop their unused
    # double buffer; it is pure noise at these toy sizes so it is omitted here.
    out_p = pl.pallas_call(
        kernel,
        out_shape=jax.ShapeDtypeStruct((B_pad, Cpad), jnp.float32),
        grid_spec=pltpu.PrefetchScalarGridSpec(
            num_scalar_prefetch=0,
            grid=(nb, n_tc),
            in_specs=[
                pl.BlockSpec((TCHUNK, TB, H), lambda b, t: (t, b, 0)),  # gi_r
                pl.BlockSpec((TCHUNK, TB, H), lambda b, t: (t, b, 0)),  # gi_z
                pl.BlockSpec((TCHUNK, TB, H), lambda b, t: (t, b, 0)),  # gi_n
                pl.BlockSpec((H, 3 * H), lambda b, t: (0, 0)),          # W_hh^T fused
                pl.BlockSpec((1, H), lambda b, t: (0, 0)),              # b_hh_n
                pl.BlockSpec((H, Cpad), lambda b, t: (0, 0)),           # fc W^T (padded)
                pl.BlockSpec((1, Cpad), lambda b, t: (0, 0)),           # fc b  (padded)
            ],
            out_specs=pl.BlockSpec((TB, Cpad), lambda b, t: (b, 0)),
            scratch_shapes=[pltpu.VMEM((TB, H), jnp.float32)],          # h carry
        ),
        compiler_params=pltpu.CompilerParams(
            dimension_semantics=("parallel", "arbitrary"),  # batch tiles shard on v7x TCs
            vmem_limit_bytes=48 * 1024 * 1024,              # headroom under v7x's 64 MiB
        ),
    )(gi_r, gi_z, gi_n, whh_cat, bhh_n, fcw, fcb)

    return out_p[:B, :C].astype(x.dtype)


def init_params(key, input_size, hidden_size, num_classes):
    """Deterministic init mimicking PyTorch's uniform(-1/sqrt(H), 1/sqrt(H))."""
    k = 1.0 / jnp.sqrt(jnp.float32(hidden_size))
    ks = jax.random.split(key, 6)
    u = lambda kk, shape: jax.random.uniform(kk, shape, jnp.float32, -k, k)
    return {
        "w_ih": u(ks[0], (3 * hidden_size, input_size)),
        "w_hh": u(ks[1], (3 * hidden_size, hidden_size)),
        "b_ih": u(ks[2], (3 * hidden_size,)),
        "b_hh": u(ks[3], (3 * hidden_size,)),
        "fc_w": u(ks[4], (num_classes, hidden_size)),
        "fc_b": u(ks[5], (num_classes,)),
    }


def gru_forward_ref(x, params):
    """Pure-JAX f32 reference of the PyTorch forward (eval mode)."""
    B, T, I = x.shape
    H = params["w_hh"].shape[1]
    h = jnp.zeros((B, H), jnp.float32)
    for t in range(T):
        gi = x[:, t, :] @ params["w_ih"].T + params["b_ih"]
        gh = h @ params["w_hh"].T + params["b_hh"]
        i_r, i_z, i_n = gi[:, :H], gi[:, H:2 * H], gi[:, 2 * H:]
        h_r, h_z, h_n = gh[:, :H], gh[:, H:2 * H], gh[:, 2 * H:]
        r = jax.nn.sigmoid(i_r + h_r)
        z = jax.nn.sigmoid(i_z + h_z)
        n = jnp.tanh(i_n + r * h_n)
        h = (1.0 - z) * n + z * h
    return h @ params["fc_w"].T + params["fc_b"]


if __name__ == "__main__":
    B, T, I, H, C = 8, 8, 16, 32, 10

    key = jax.random.PRNGKey(0)
    kx, kp = jax.random.split(key)
    x = jax.random.normal(kx, (B, T, I), jnp.float32)
    params = init_params(kp, I, H, C)

    out = jax.block_until_ready(gru_forward(x, params))

    ref = gru_forward_ref(x, params)
    assert out.shape == (B, C)
    # bf16 MXU operands (per perf review) => looser tolerance than the f32 run.
    assert jnp.allclose(out, ref, atol=2e-2, rtol=2e-2), "mismatch vs reference"

    print("KERNEL_OK")
</pallas_src>

<mosaic_0001>
module attributes {stable_mosaic.version = 11 : i64} {
  func.func @gru_kernel(%arg0: i32, %arg1: i32, %arg2: memref<8x8x32xbf16, #tpu.memory_space<vmem>>, %arg3: memref<8x8x32xbf16, #tpu.memory_space<vmem>>, %arg4: memref<8x8x32xbf16, #tpu.memory_space<vmem>>, %arg5: memref<32x96xbf16, #tpu.memory_space<vmem>>, %arg6: memref<1x32xf32, #tpu.memory_space<vmem>>, %arg7: memref<32x128xbf16, #tpu.memory_space<vmem>>, %arg8: memref<1x128xf32, #tpu.memory_space<vmem>>, %arg9: memref<8x128xf32, #tpu.memory_space<vmem>>, %arg10: memref<8x32xf32, #tpu.memory_space<vmem>>) attributes {dimension_semantics = [#tpu.dimension_semantics<parallel>, #tpu.dimension_semantics<arbitrary>], iteration_bounds = array<i64: 1, 1>, scalar_prefetch = 0 : i64, scratch_operands = 1 : i64, tpu.core_type = #tpu.core_type<tc>, window_params = [{transform_indices = @transform_0, window_bounds = array<i64: 8, 8, 32>}, {transform_indices = @transform_1, window_bounds = array<i64: 8, 8, 32>}, {transform_indices = @transform_2, window_bounds = array<i64: 8, 8, 32>}, {pipeline_mode = #tpu.pipeline_mode<synchronous>, transform_indices = @transform_3, window_bounds = array<i64: 32, 96>}, {pipeline_mode = #tpu.pipeline_mode<synchronous>, transform_indices = @transform_4, window_bounds = array<i64: 1, 32>}, {pipeline_mode = #tpu.pipeline_mode<synchronous>, transform_indices = @transform_5, window_bounds = array<i64: 32, 128>}, {pipeline_mode = #tpu.pipeline_mode<synchronous>, transform_indices = @transform_6, window_bounds = array<i64: 1, 128>}, {transform_indices = @transform_7, window_bounds = array<i64: 8, 128>}]} {
    %c0_i32 = arith.constant 0 : i32
    %0 = arith.cmpi eq, %arg1, %c0_i32 : i32
    %1 = arith.extui %0 : i1 to i32
    %c0_i32_0 = arith.constant 0 : i32
    %2 = arith.cmpi ne, %1, %c0_i32_0 : i32
    scf.if %2 {
      %cst_90 = arith.constant 0.000000e+00 : f32
      %316 = vector.broadcast %cst_90 : f32 to vector<8x32xf32>
      %c0_91 = arith.constant 0 : index
      %c0_92 = arith.constant 0 : index
      %317 = vector.load %arg10[%c0_91, %c0_92] : memref<8x32xf32, #tpu.memory_space<vmem>>, vector<8x32xf32>
      tpu.vector_store %arg10[%c0_91, %c0_92], %316 {strides = array<i32>} : memref<8x32xf32, #tpu.memory_space<vmem>>, vector<8x32xf32>,
    } else {
    }
    %c0 = arith.constant 0 : index
    %c0_1 = arith.constant 0 : index
    %3 = vector.load %arg5[%c0, %c0_1] : memref<32x96xbf16, #tpu.memory_space<vmem>>, vector<32x96xbf16>
    %c0_2 = arith.constant 0 : index
    %c0_3 = arith.constant 0 : index
    %4 = vector.load %arg6[%c0_2, %c0_3] : memref<1x32xf32, #tpu.memory_space<vmem>>, vector<1x32xf32>
    %5 = vector.shape_cast %4 : vector<1x32xf32> to vector<1x32xf32>
    %6 = vector.broadcast %5 : vector<1x32xf32> to vector<8x32xf32>
    %c0_4 = arith.constant 0 : index
    %c0_5 = arith.constant 0 : index
    %7 = vector.load %arg10[%c0_4, %c0_5] : memref<8x32xf32, #tpu.memory_space<vmem>>, vector<8x32xf32>
    %c0_i32_6 = arith.constant 0 : i32
    %8 = arith.truncf %7 : vector<8x32xf32> to vector<8x32xbf16>
    %cst = arith.constant dense<0.000000e+00> : vector<8x96xf32>
    %9 = tpu.matmul %8, %3, %cst {dimension_numbers = #tpu.dot_dimension_numbers<[1], [0], [0], [1], [0, 0, 1, 1], [], []>} : vector<8x32xbf16>, vector<32x96xbf16>, vector<8x96xf32> -> vector<8x96xf32>
    %10 = arith.index_cast %c0_i32_6 : i32 to index
    %c0_7 = arith.constant 0 : index
    %c0_8 = arith.constant 0 : index
    %11 = vector.load %arg2[%10, %c0_7, %c0_8] : memref<8x8x32xbf16, #tpu.memory_space<vmem>>, vector<1x8x32xbf16>
    %12 = vector.shape_cast %11 : vector<1x8x32xbf16> to vector<8x32xbf16>
    %13 = arith.extf %12 : vector<8x32xbf16> to vector<8x32xf32>
    %14 = vector.extract_strided_slice %9 {offsets = [0, 0], sizes = [8, 32], strides = [1, 1]} : vector<8x96xf32> to vector<8x32xf32>
    %15 = arith.addf %13, %14 : vector<8x32xf32>
    %16 = arith.index_cast %c0_i32_6 : i32 to index
    %c0_9 = arith.constant 0 : index
    %c0_10 = arith.constant 0 : index
    %17 = vector.load %arg3[%16, %c0_9, %c0_10] : memref<8x8x32xbf16, #tpu.memory_space<vmem>>, vector<1x8x32xbf16>
    %18 = vector.shape_cast %17 : vector<1x8x32xbf16> to vector<8x32xbf16>
    %19 = arith.extf %18 : vector<8x32xbf16> to vector<8x32xf32>
    %20 = vector.extract_strided_slice %9 {offsets = [0, 32], sizes = [8, 32], strides = [1, 1]} : vector<8x96xf32> to vector<8x32xf32>
    %21 = arith.addf %19, %20 : vector<8x32xf32>
    %22 = vector.extract_strided_slice %9 {offsets = [0, 64], sizes = [8, 32], strides = [1, 1]} : vector<8x96xf32> to vector<8x32xf32>
    %23 = arith.addf %22, %6 : vector<8x32xf32>
    %24 = arith.negf %15 : vector<8x32xf32>
    %25 = math.exp %24 : vector<8x32xf32>
    %cst_11 = arith.constant 1.000000e+00 : f32
    %26 = vector.broadcast %cst_11 : f32 to vector<8x32xf32>
    %27 = arith.addf %26, %25 : vector<8x32xf32>
    %28 = arith.divf %26, %27 : vector<8x32xf32>
    %29 = arith.negf %21 : vector<8x32xf32>
    %30 = math.exp %29 : vector<8x32xf32>
    %cst_12 = arith.constant 1.000000e+00 : f32
    %31 = vector.broadcast %cst_12 : f32 to vector<8x32xf32>
    %32 = arith.addf %31, %30 : vector<8x32xf32>
    %33 = arith.divf %31, %32 : vector<8x32xf32>
    %34 = arith.index_cast %c0_i32_6 : i32 to index
    %c0_13 = arith.constant 0 : index
    %c0_14 = arith.constant 0 : index
    %35 = vector.load %arg4[%34, %c0_13, %c0_14] : memref<8x8x32xbf16, #tpu.memory_space<vmem>>, vector<1x8x32xbf16>
    %36 = vector.shape_cast %35 : vector<1x8x32xbf16> to vector<8x32xbf16>
    %37 = arith.extf %36 : vector<8x32xbf16> to vector<8x32xf32>
    %38 = arith.mulf %28, %23 : vector<8x32xf32>
    %39 = arith.addf %37, %38 : vector<8x32xf32>
    %40 = math.tanh %39 : vector<8x32xf32>
    %cst_15 = arith.constant 1.000000e+00 : f32
    %41 = vector.broadcast %cst_15 : f32 to vector<8x32xf32>
    %42 = arith.subf %41, %33 : vector<8x32xf32>
    %43 = arith.mulf %42, %40 : vector<8x32xf32>
    %44 = arith.mulf %33, %7 : vector<8x32xf32>
    %45 = arith.addf %43, %44 : vector<8x32xf32>
    %c1_i32 = arith.constant 1 : i32
    %46 = arith.truncf %45 : vector<8x32xf32> to vector<8x32xbf16>
    %cst_16 = arith.constant dense<0.000000e+00> : vector<8x96xf32>
    %47 = tpu.matmul %46, %3, %cst_16 {dimension_numbers = #tpu.dot_dimension_numbers<[1], [0], [0], [1], [0, 0, 1, 1], [], []>} : vector<8x32xbf16>, vector<32x96xbf16>, vector<8x96xf32> -> vector<8x96xf32>
    %48 = arith.index_cast %c1_i32 : i32 to index
    %c0_17 = arith.constant 0 : index
    %c0_18 = arith.constant 0 : index
    %49 = vector.load %arg2[%48, %c0_17, %c0_18] : memref<8x8x32xbf16, #tpu.memory_space<vmem>>, vector<1x8x32xbf16>
    %50 = vector.shape_cast %49 : vector<1x8x32xbf16> to vector<8x32xbf16>
    %51 = arith.extf %50 : vector<8x32xbf16> to vector<8x32xf32>
    %52 = vector.extract_strided_slice %47 {offsets = [0, 0], sizes = [8, 32], strides = [1, 1]} : vector<8x96xf32> to vector<8x32xf32>
    %53 = arith.addf %51, %52 : vector<8x32xf32>
    %54 = arith.index_cast %c1_i32 : i32 to index
    %c0_19 = arith.constant 0 : index
    %c0_20 = arith.constant 0 : index
    %55 = vector.load %arg3[%54, %c0_19, %c0_20] : memref<8x8x32xbf16, #tpu.memory_space<vmem>>, vector<1x8x32xbf16>
    %56 = vector.shape_cast %55 : vector<1x8x32xbf16> to vector<8x32xbf16>
    %57 = arith.extf %56 : vector<8x32xbf16> to vector<8x32xf32>
    %58 = vector.extract_strided_slice %47 {offsets = [0, 32], sizes = [8, 32], strides = [1, 1]} : vector<8x96xf32> to vector<8x32xf32>
    %59 = arith.addf %57, %58 : vector<8x32xf32>
    %60 = vector.extract_strided_slice %47 {offsets = [0, 64], sizes = [8, 32], strides = [1, 1]} : vector<8x96xf32> to vector<8x32xf32>
    %61 = arith.addf %60, %6 : vector<8x32xf32>
    %62 = arith.negf %53 : vector<8x32xf32>
    %63 = math.exp %62 : vector<8x32xf32>
    %cst_21 = arith.constant 1.000000e+00 : f32
    %64 = vector.broadcast %cst_21 : f32 to vector<8x32xf32>
    %65 = arith.addf %64, %63 : vector<8x32xf32>
    %66 = arith.divf %64, %65 : vector<8x32xf32>
    %67 = arith.negf %59 : vector<8x32xf32>
    %68 = math.exp %67 : vector<8x32xf32>
    %cst_22 = arith.constant 1.000000e+00 : f32
    %69 = vector.broadcast %cst_22 : f32 to vector<8x32xf32>
    %70 = arith.addf %69, %68 : vector<8x32xf32>
    %71 = arith.divf %69, %70 : vector<8x32xf32>
    %72 = arith.index_cast %c1_i32 : i32 to index
    %c0_23 = arith.constant 0 : index
    %c0_24 = arith.constant 0 : index
    %73 = vector.load %arg4[%72, %c0_23, %c0_24] : memref<8x8x32xbf16, #tpu.memory_space<vmem>>, vector<1x8x32xbf16>
    %74 = vector.shape_cast %73 : vector<1x8x32xbf16> to vector<8x32xbf16>
    %75 = arith.extf %74 : vector<8x32xbf16> to vector<8x32xf32>
    %76 = arith.mulf %66, %61 : vector<8x32xf32>
    %77 = arith.addf %75, %76 : vector<8x32xf32>
    %78 = math.tanh %77 : vector<8x32xf32>
    %cst_25 = arith.constant 1.000000e+00 : f32
    %79 = vector.broadcast %cst_25 : f32 to vector<8x32xf32>
    %80 = arith.subf %79, %71 : vector<8x32xf32>
    %81 = arith.mulf %80, %78 : vector<8x32xf32>
    %82 = arith.mulf %71, %45 : vector<8x32xf32>
    %83 = arith.addf %81, %82 : vector<8x32xf32>
    %c2_i32 = arith.constant 2 : i32
    %84 = arith.truncf %83 : vector<8x32xf32> to vector<8x32xbf16>
    %cst_26 = arith.constant dense<0.000000e+00> : vector<8x96xf32>
    %85 = tpu.matmul %84, %3, %cst_26 {dimension_numbers = #tpu.dot_dimension_numbers<[1], [0], [0], [1], [0, 0, 1, 1], [], []>} : vector<8x32xbf16>, vector<32x96xbf16>, vector<8x96xf32> -> vector<8x96xf32>
    %86 = arith.index_cast %c2_i32 : i32 to index
    %c0_27 = arith.constant 0 : index
    %c0_28 = arith.constant 0 : index
    %87 = vector.load %arg2[%86, %c0_27, %c0_28] : memref<8x8x32xbf16, #tpu.memory_space<vmem>>, vector<1x8x32xbf16>
    %88 = vector.shape_cast %87 : vector<1x8x32xbf16> to vector<8x32xbf16>
    %89 = arith.extf %88 : vector<8x32xbf16> to vector<8x32xf32>
    %90 = vector.extract_strided_slice %85 {offsets = [0, 0], sizes = [8, 32], strides = [1, 1]} : vector<8x96xf32> to vector<8x32xf32>
    %91 = arith.addf %89, %90 : vector<8x32xf32>
    %92 = arith.index_cast %c2_i32 : i32 to index
    %c0_29 = arith.constant 0 : index
    %c0_30 = arith.constant 0 : index
    %93 = vector.load %arg3[%92, %c0_29, %c0_30] : memref<8x8x32xbf16, #tpu.memory_space<vmem>>, vector<1x8x32xbf16>
    %94 = vector.shape_cast %93 : vector<1x8x32xbf16> to vector<8x32xbf16>
    %95 = arith.extf %94 : vector<8x32xbf16> to vector<8x32xf32>
    %96 = vector.extract_strided_slice %85 {offsets = [0, 32], sizes = [8, 32], strides = [1, 1]} : vector<8x96xf32> to vector<8x32xf32>
    %97 = arith.addf %95, %96 : vector<8x32xf32>
    %98 = vector.extract_strided_slice %85 {offsets = [0, 64], sizes = [8, 32], strides = [1, 1]} : vector<8x96xf32> to vector<8x32xf32>
    %99 = arith.addf %98, %6 : vector<8x32xf32>
    %100 = arith.negf %91 : vector<8x32xf32>
    %101 = math.exp %100 : vector<8x32xf32>
    %cst_31 = arith.constant 1.000000e+00 : f32
    %102 = vector.broadcast %cst_31 : f32 to vector<8x32xf32>
    %103 = arith.addf %102, %101 : vector<8x32xf32>
    %104 = arith.divf %102, %103 : vector<8x32xf32>
    %105 = arith.negf %97 : vector<8x32xf32>
    %106 = math.exp %105 : vector<8x32xf32>
    %cst_32 = arith.constant 1.000000e+00 : f32
    %107 = vector.broadcast %cst_32 : f32 to vector<8x32xf32>
    %108 = arith.addf %107, %106 : vector<8x32xf32>
    %109 = arith.divf %107, %108 : vector<8x32xf32>
    %110 = arith.index_cast %c2_i32 : i32 to index
    %c0_33 = arith.constant 0 : index
    %c0_34 = arith.constant 0 : index
    %111 = vector.load %arg4[%110, %c0_33, %c0_34] : memref<8x8x32xbf16, #tpu.memory_space<vmem>>, vector<1x8x32xbf16>
    %112 = vector.shape_cast %111 : vector<1x8x32xbf16> to vector<8x32xbf16>
    %113 = arith.extf %112 : vector<8x32xbf16> to vector<8x32xf32>
    %114 = arith.mulf %104, %99 : vector<8x32xf32>
    %115 = arith.addf %113, %114 : vector<8x32xf32>
    %116 = math.tanh %115 : vector<8x32xf32>
    %cst_35 = arith.constant 1.000000e+00 : f32
    %117 = vector.broadcast %cst_35 : f32 to vector<8x32xf32>
    %118 = arith.subf %117, %109 : vector<8x32xf32>
    %119 = arith.mulf %118, %116 : vector<8x32xf32>
    %120 = arith.mulf %109, %83 : vector<8x32xf32>
    %121 = arith.addf %119, %120 : vector<8x32xf32>
    %c3_i32 = arith.constant 3 : i32
    %122 = arith.truncf %121 : vector<8x32xf32> to vector<8x32xbf16>
    %cst_36 = arith.constant dense<0.000000e+00> : vector<8x96xf32>
    %123 = tpu.matmul %122, %3, %cst_36 {dimension_numbers = #tpu.dot_dimension_numbers<[1], [0], [0], [1], [0, 0, 1, 1], [], []>} : vector<8x32xbf16>, vector<32x96xbf16>, vector<8x96xf32> -> vector<8x96xf32>
    %124 = arith.index_cast %c3_i32 : i32 to index
    %c0_37 = arith.constant 0 : index
    %c0_38 = arith.constant 0 : index
    %125 = vector.load %arg2[%124, %c0_37, %c0_38] : memref<8x8x32xbf16, #tpu.memory_space<vmem>>, vector<1x8x32xbf16>
    %126 = vector.shape_cast %125 : vector<1x8x32xbf16> to vector<8x32xbf16>
    %127 = arith.extf %126 : vector<8x32xbf16> to vector<8x32xf32>
    %128 = vector.extract_strided_slice %123 {offsets = [0, 0], sizes = [8, 32], strides = [1, 1]} : vector<8x96xf32> to vector<8x32xf32>
    %129 = arith.addf %127, %128 : vector<8x32xf32>
    %130 = arith.index_cast %c3_i32 : i32 to index
    %c0_39 = arith.constant 0 : index
    %c0_40 = arith.constant 0 : index
    %131 = vector.load %arg3[%130, %c0_39, %c0_40] : memref<8x8x32xbf16, #tpu.memory_space<vmem>>, vector<1x8x32xbf16>
    %132 = vector.shape_cast %131 : vector<1x8x32xbf16> to vector<8x32xbf16>
    %133 = arith.extf %132 : vector<8x32xbf16> to vector<8x32xf32>
    %134 = vector.extract_strided_slice %123 {offsets = [0, 32], sizes = [8, 32], strides = [1, 1]} : vector<8x96xf32> to vector<8x32xf32>
    %135 = arith.addf %133, %134 : vector<8x32xf32>
    %136 = vector.extract_strided_slice %123 {offsets = [0, 64], sizes = [8, 32], strides = [1, 1]} : vector<8x96xf32> to vector<8x32xf32>
    %137 = arith.addf %136, %6 : vector<8x32xf32>
    %138 = arith.negf %129 : vector<8x32xf32>
    %139 = math.exp %138 : vector<8x32xf32>
    %cst_41 = arith.constant 1.000000e+00 : f32
    %140 = vector.broadcast %cst_41 : f32 to vector<8x32xf32>
    %141 = arith.addf %140, %139 : vector<8x32xf32>
    %142 = arith.divf %140, %141 : vector<8x32xf32>
    %143 = arith.negf %135 : vector<8x32xf32>
    %144 = math.exp %143 : vector<8x32xf32>
    %cst_42 = arith.constant 1.000000e+00 : f32
    %145 = vector.broadcast %cst_42 : f32 to vector<8x32xf32>
    %146 = arith.addf %145, %144 : vector<8x32xf32>
    %147 = arith.divf %145, %146 : vector<8x32xf32>
    %148 = arith.index_cast %c3_i32 : i32 to index
    %c0_43 = arith.constant 0 : index
    %c0_44 = arith.constant 0 : index
    %149 = vector.load %arg4[%148, %c0_43, %c0_44] : memref<8x8x32xbf16, #tpu.memory_space<vmem>>, vector<1x8x32xbf16>
    %150 = vector.shape_cast %149 : vector<1x8x32xbf16> to vector<8x32xbf16>
    %151 = arith.extf %150 : vector<8x32xbf16> to vector<8x32xf32>
    %152 = arith.mulf %142, %137 : vector<8x32xf32>
    %153 = arith.addf %151, %152 : vector<8x32xf32>
    %154 = math.tanh %153 : vector<8x32xf32>
    %cst_45 = arith.constant 1.000000e+00 : f32
    %155 = vector.broadcast %cst_45 : f32 to vector<8x32xf32>
    %156 = arith.subf %155, %147 : vector<8x32xf32>
    %157 = arith.mulf %156, %154 : vector<8x32xf32>
    %158 = arith.mulf %147, %121 : vector<8x32xf32>
    %159 = arith.addf %157, %158 : vector<8x32xf32>
    %c4_i32 = arith.constant 4 : i32
    %160 = arith.truncf %159 : vector<8x32xf32> to vector<8x32xbf16>
    %cst_46 = arith.constant dense<0.000000e+00> : vector<8x96xf32>
    %161 = tpu.matmul %160, %3, %cst_46 {dimension_numbers = #tpu.dot_dimension_numbers<[1], [0], [0], [1], [0, 0, 1, 1], [], []>} : vector<8x32xbf16>, vector<32x96xbf16>, vector<8x96xf32> -> vector<8x96xf32>
    %162 = arith.index_cast %c4_i32 : i32 to index
    %c0_47 = arith.constant 0 : index
    %c0_48 = arith.constant 0 : index
    %163 = vector.load %arg2[%162, %c0_47, %c0_48] : memref<8x8x32xbf16, #tpu.memory_space<vmem>>, vector<1x8x32xbf16>
    %164 = vector.shape_cast %163 : vector<1x8x32xbf16> to vector<8x32xbf16>
    %165 = arith.extf %164 : vector<8x32xbf16> to vector<8x32xf32>
    %166 = vector.extract_strided_slice %161 {offsets = [0, 0], sizes = [8, 32], strides = [1, 1]} : vector<8x96xf32> to vector<8x32xf32>
    %167 = arith.addf %165, %166 : vector<8x32xf32>
    %168 = arith.index_cast %c4_i32 : i32 to index
    %c0_49 = arith.constant 0 : index
    %c0_50 = arith.constant 0 : index
    %169 = vector.load %arg3[%168, %c0_49, %c0_50] : memref<8x8x32xbf16, #tpu.memory_space<vmem>>, vector<1x8x32xbf16>
    %170 = vector.shape_cast %169 : vector<1x8x32xbf16> to vector<8x32xbf16>
    %171 = arith.extf %170 : vector<8x32xbf16> to vector<8x32xf32>
    %172 = vector.extract_strided_slice %161 {offsets = [0, 32], sizes = [8, 32], strides = [1, 1]} : vector<8x96xf32> to vector<8x32xf32>
    %173 = arith.addf %171, %172 : vector<8x32xf32>
    %174 = vector.extract_strided_slice %161 {offsets = [0, 64], sizes = [8, 32], strides = [1, 1]} : vector<8x96xf32> to vector<8x32xf32>
    %175 = arith.addf %174, %6 : vector<8x32xf32>
    %176 = arith.negf %167 : vector<8x32xf32>
    %177 = math.exp %176 : vector<8x32xf32>
    %cst_51 = arith.constant 1.000000e+00 : f32
    %178 = vector.broadcast %cst_51 : f32 to vector<8x32xf32>
    %179 = arith.addf %178, %177 : vector<8x32xf32>
    %180 = arith.divf %178, %179 : vector<8x32xf32>
    %181 = arith.negf %173 : vector<8x32xf32>
    %182 = math.exp %181 : vector<8x32xf32>
    %cst_52 = arith.constant 1.000000e+00 : f32
    %183 = vector.broadcast %cst_52 : f32 to vector<8x32xf32>
    %184 = arith.addf %183, %182 : vector<8x32xf32>
    %185 = arith.divf %183, %184 : vector<8x32xf32>
    %186 = arith.index_cast %c4_i32 : i32 to index
    %c0_53 = arith.constant 0 : index
    %c0_54 = arith.constant 0 : index
    %187 = vector.load %arg4[%186, %c0_53, %c0_54] : memref<8x8x32xbf16, #tpu.memory_space<vmem>>, vector<1x8x32xbf16>
    %188 = vector.shape_cast %187 : vector<1x8x32xbf16> to vector<8x32xbf16>
    %189 = arith.extf %188 : vector<8x32xbf16> to vector<8x32xf32>
    %190 = arith.mulf %180, %175 : vector<8x32xf32>
    %191 = arith.addf %189, %190 : vector<8x32xf32>
    %192 = math.tanh %191 : vector<8x32xf32>
    %cst_55 = arith.constant 1.000000e+00 : f32
    %193 = vector.broadcast %cst_55 : f32 to vector<8x32xf32>
    %194 = arith.subf %193, %185 : vector<8x32xf32>
    %195 = arith.mulf %194, %192 : vector<8x32xf32>
    %196 = arith.mulf %185, %159 : vector<8x32xf32>
    %197 = arith.addf %195, %196 : vector<8x32xf32>
    %c5_i32 = arith.constant 5 : i32
    %198 = arith.truncf %197 : vector<8x32xf32> to vector<8x32xbf16>
    %cst_56 = arith.constant dense<0.000000e+00> : vector<8x96xf32>
    %199 = tpu.matmul %198, %3, %cst_56 {dimension_numbers = #tpu.dot_dimension_numbers<[1], [0], [0], [1], [0, 0, 1, 1], [], []>} : vector<8x32xbf16>, vector<32x96xbf16>, vector<8x96xf32> -> vector<8x96xf32>
    %200 = arith.index_cast %c5_i32 : i32 to index
    %c0_57 = arith.constant 0 : index
    %c0_58 = arith.constant 0 : index
    %201 = vector.load %arg2[%200, %c0_57, %c0_58] : memref<8x8x32xbf16, #tpu.memory_space<vmem>>, vector<1x8x32xbf16>
    %202 = vector.shape_cast %201 : vector<1x8x32xbf16> to vector<8x32xbf16>
    %203 = arith.extf %202 : vector<8x32xbf16> to vector<8x32xf32>
    %204 = vector.extract_strided_slice %199 {offsets = [0, 0], sizes = [8, 32], strides = [1, 1]} : vector<8x96xf32> to vector<8x32xf32>
    %205 = arith.addf %203, %204 : vector<8x32xf32>
    %206 = arith.index_cast %c5_i32 : i32 to index
    %c0_59 = arith.constant 0 : index
    %c0_60 = arith.constant 0 : index
    %207 = vector.load %arg3[%206, %c0_59, %c0_60] : memref<8x8x32xbf16, #tpu.memory_space<vmem>>, vector<1x8x32xbf16>
    %208 = vector.shape_cast %207 : vector<1x8x32xbf16> to vector<8x32xbf16>
    %209 = arith.extf %208 : vector<8x32xbf16> to vector<8x32xf32>
    %210 = vector.extract_strided_slice %199 {offsets = [0, 32], sizes = [8, 32], strides = [1, 1]} : vector<8x96xf32> to vector<8x32xf32>
    %211 = arith.addf %209, %210 : vector<8x32xf32>
    %212 = vector.extract_strided_slice %199 {offsets = [0, 64], sizes = [8, 32], strides = [1, 1]} : vector<8x96xf32> to vector<8x32xf32>
    %213 = arith.addf %212, %6 : vector<8x32xf32>
    %214 = arith.negf %205 : vector<8x32xf32>
    %215 = math.exp %214 : vector<8x32xf32>
    %cst_61 = arith.constant 1.000000e+00 : f32
    %216 = vector.broadcast %cst_61 : f32 to vector<8x32xf32>
    %217 = arith.addf %216, %215 : vector<8x32xf32>
    %218 = arith.divf %216, %217 : vector<8x32xf32>
    %219 = arith.negf %211 : vector<8x32xf32>
    %220 = math.exp %219 : vector<8x32xf32>
    %cst_62 = arith.constant 1.000000e+00 : f32
    %221 = vector.broadcast %cst_62 : f32 to vector<8x32xf32>
    %222 = arith.addf %221, %220 : vector<8x32xf32>
    %223 = arith.divf %221, %222 : vector<8x32xf32>
    %224 = arith.index_cast %c5_i32 : i32 to index
    %c0_63 = arith.constant 0 : index
    %c0_64 = arith.constant 0 : index
    %225 = vector.load %arg4[%224, %c0_63, %c0_64] : memref<8x8x32xbf16, #tpu.memory_space<vmem>>, vector<1x8x32xbf16>
    %226 = vector.shape_cast %225 : vector<1x8x32xbf16> to vector<8x32xbf16>
    %227 = arith.extf %226 : vector<8x32xbf16> to vector<8x32xf32>
    %228 = arith.mulf %218, %213 : vector<8x32xf32>
    %229 = arith.addf %227, %228 : vector<8x32xf32>
    %230 = math.tanh %229 : vector<8x32xf32>
    %cst_65 = arith.constant 1.000000e+00 : f32
    %231 = vector.broadcast %cst_65 : f32 to vector<8x32xf32>
    %232 = arith.subf %231, %223 : vector<8x32xf32>
    %233 = arith.mulf %232, %230 : vector<8x32xf32>
    %234 = arith.mulf %223, %197 : vector<8x32xf32>
    %235 = arith.addf %233, %234 : vector<8x32xf32>
    %c6_i32 = arith.constant 6 : i32
    %236 = arith.truncf %235 : vector<8x32xf32> to vector<8x32xbf16>
    %cst_66 = arith.constant dense<0.000000e+00> : vector<8x96xf32>
    %237 = tpu.matmul %236, %3, %cst_66 {dimension_numbers = #tpu.dot_dimension_numbers<[1], [0], [0], [1], [0, 0, 1, 1], [], []>} : vector<8x32xbf16>, vector<32x96xbf16>, vector<8x96xf32> -> vector<8x96xf32>
    %238 = arith.index_cast %c6_i32 : i32 to index
    %c0_67 = arith.constant 0 : index
    %c0_68 = arith.constant 0 : index
    %239 = vector.load %arg2[%238, %c0_67, %c0_68] : memref<8x8x32xbf16, #tpu.memory_space<vmem>>, vector<1x8x32xbf16>
    %240 = vector.shape_cast %239 : vector<1x8x32xbf16> to vector<8x32xbf16>
    %241 = arith.extf %240 : vector<8x32xbf16> to vector<8x32xf32>
    %242 = vector.extract_strided_slice %237 {offsets = [0, 0], sizes = [8, 32], strides = [1, 1]} : vector<8x96xf32> to vector<8x32xf32>
    %243 = arith.addf %241, %242 : vector<8x32xf32>
    %244 = arith.index_cast %c6_i32 : i32 to index
    %c0_69 = arith.constant 0 : index
    %c0_70 = arith.constant 0 : index
    %245 = vector.load %arg3[%244, %c0_69, %c0_70] : memref<8x8x32xbf16, #tpu.memory_space<vmem>>, vector<1x8x32xbf16>
    %246 = vector.shape_cast %245 : vector<1x8x32xbf16> to vector<8x32xbf16>
    %247 = arith.extf %246 : vector<8x32xbf16> to vector<8x32xf32>
    %248 = vector.extract_strided_slice %237 {offsets = [0, 32], sizes = [8, 32], strides = [1, 1]} : vector<8x96xf32> to vector<8x32xf32>
    %249 = arith.addf %247, %248 : vector<8x32xf32>
    %250 = vector.extract_strided_slice %237 {offsets = [0, 64], sizes = [8, 32], strides = [1, 1]} : vector<8x96xf32> to vector<8x32xf32>
    %251 = arith.addf %250, %6 : vector<8x32xf32>
    %252 = arith.negf %243 : vector<8x32xf32>
    %253 = math.exp %252 : vector<8x32xf32>
    %cst_71 = arith.constant 1.000000e+00 : f32
    %254 = vector.broadcast %cst_71 : f32 to vector<8x32xf32>
    %255 = arith.addf %254, %253 : vector<8x32xf32>
    %256 = arith.divf %254, %255 : vector<8x32xf32>
    %257 = arith.negf %249 : vector<8x32xf32>
    %258 = math.exp %257 : vector<8x32xf32>
    %cst_72 = arith.constant 1.000000e+00 : f32
    %259 = vector.broadcast %cst_72 : f32 to vector<8x32xf32>
    %260 = arith.addf %259, %258 : vector<8x32xf32>
    %261 = arith.divf %259, %260 : vector<8x32xf32>
    %262 = arith.index_cast %c6_i32 : i32 to index
    %c0_73 = arith.constant 0 : index
    %c0_74 = arith.constant 0 : index
    %263 = vector.load %arg4[%262, %c0_73, %c0_74] : memref<8x8x32xbf16, #tpu.memory_space<vmem>>, vector<1x8x32xbf16>
    %264 = vector.shape_cast %263 : vector<1x8x32xbf16> to vector<8x32xbf16>
    %265 = arith.extf %264 : vector<8x32xbf16> to vector<8x32xf32>
    %266 = arith.mulf %256, %251 : vector<8x32xf32>
    %267 = arith.addf %265, %266 : vector<8x32xf32>
    %268 = math.tanh %267 : vector<8x32xf32>
    %cst_75 = arith.constant 1.000000e+00 : f32
    %269 = vector.broadcast %cst_75 : f32 to vector<8x32xf32>
    %270 = arith.subf %269, %261 : vector<8x32xf32>
    %271 = arith.mulf %270, %268 : vector<8x32xf32>
    %272 = arith.mulf %261, %235 : vector<8x32xf32>
    %273 = arith.addf %271, %272 : vector<8x32xf32>
    %c7_i32 = arith.constant 7 : i32
    %274 = arith.truncf %273 : vector<8x32xf32> to vector<8x32xbf16>
    %cst_76 = arith.constant dense<0.000000e+00> : vector<8x96xf32>
    %275 = tpu.matmul %274, %3, %cst_76 {dimension_numbers = #tpu.dot_dimension_numbers<[1], [0], [0], [1], [0, 0, 1, 1], [], []>} : vector<8x32xbf16>, vector<32x96xbf16>, vector<8x96xf32> -> vector<8x96xf32>
    %276 = arith.index_cast %c7_i32 : i32 to index
    %c0_77 = arith.constant 0 : index
    %c0_78 = arith.constant 0 : index
    %277 = vector.load %arg2[%276, %c0_77, %c0_78] : memref<8x8x32xbf16, #tpu.memory_space<vmem>>, vector<1x8x32xbf16>
    %278 = vector.shape_cast %277 : vector<1x8x32xbf16> to vector<8x32xbf16>
    %279 = arith.extf %278 : vector<8x32xbf16> to vector<8x32xf32>
    %280 = vector.extract_strided_slice %275 {offsets = [0, 0], sizes = [8, 32], strides = [1, 1]} : vector<8x96xf32> to vector<8x32xf32>
    %281 = arith.addf %279, %280 : vector<8x32xf32>
    %282 = arith.index_cast %c7_i32 : i32 to index
    %c0_79 = arith.constant 0 : index
    %c0_80 = arith.constant 0 : index
    %283 = vector.load %arg3[%282, %c0_79, %c0_80] : memref<8x8x32xbf16, #tpu.memory_space<vmem>>, vector<1x8x32xbf16>
    %284 = vector.shape_cast %283 : vector<1x8x32xbf16> to vector<8x32xbf16>
    %285 = arith.extf %284 : vector<8x32xbf16> to vector<8x32xf32>
    %286 = vector.extract_strided_slice %275 {offsets = [0, 32], sizes = [8, 32], strides = [1, 1]} : vector<8x96xf32> to vector<8x32xf32>
    %287 = arith.addf %285, %286 : vector<8x32xf32>
    %288 = vector.extract_strided_slice %275 {offsets = [0, 64], sizes = [8, 32], strides = [1, 1]} : vector<8x96xf32> to vector<8x32xf32>
    %289 = arith.addf %288, %6 : vector<8x32xf32>
    %290 = arith.negf %281 : vector<8x32xf32>
    %291 = math.exp %290 : vector<8x32xf32>
    %cst_81 = arith.constant 1.000000e+00 : f32
    %292 = vector.broadcast %cst_81 : f32 to vector<8x32xf32>
    %293 = arith.addf %292, %291 : vector<8x32xf32>
    %294 = arith.divf %292, %293 : vector<8x32xf32>
    %295 = arith.negf %287 : vector<8x32xf32>
    %296 = math.exp %295 : vector<8x32xf32>
    %cst_82 = arith.constant 1.000000e+00 : f32
    %297 = vector.broadcast %cst_82 : f32 to vector<8x32xf32>
    %298 = arith.addf %297, %296 : vector<8x32xf32>
    %299 = arith.divf %297, %298 : vector<8x32xf32>
    %300 = arith.index_cast %c7_i32 : i32 to index
    %c0_83 = arith.constant 0 : index
    %c0_84 = arith.constant 0 : index
    %301 = vector.load %arg4[%300, %c0_83, %c0_84] : memref<8x8x32xbf16, #tpu.memory_space<vmem>>, vector<1x8x32xbf16>
    %302 = vector.shape_cast %301 : vector<1x8x32xbf16> to vector<8x32xbf16>
    %303 = arith.extf %302 : vector<8x32xbf16> to vector<8x32xf32>
    %304 = arith.mulf %294, %289 : vector<8x32xf32>
    %305 = arith.addf %303, %304 : vector<8x32xf32>
    %306 = math.tanh %305 : vector<8x32xf32>
    %cst_85 = arith.constant 1.000000e+00 : f32
    %307 = vector.broadcast %cst_85 : f32 to vector<8x32xf32>
    %308 = arith.subf %307, %299 : vector<8x32xf32>
    %309 = arith.mulf %308, %306 : vector<8x32xf32>
    %310 = arith.mulf %299, %273 : vector<8x32xf32>
    %311 = arith.addf %309, %310 : vector<8x32xf32>
    %c8_i32 = arith.constant 8 : i32
    %c0_86 = arith.constant 0 : index
    %c0_87 = arith.constant 0 : index
    %312 = vector.load %arg10[%c0_86, %c0_87] : memref<8x32xf32, #tpu.memory_space<vmem>>, vector<8x32xf32>
    tpu.vector_store %arg10[%c0_86, %c0_87], %311 {strides = array<i32>} : memref<8x32xf32, #tpu.memory_space<vmem>>, vector<8x32xf32>,
    %c0_i32_88 = arith.constant 0 : i32
    %313 = arith.cmpi eq, %arg1, %c0_i32_88 : i32
    %314 = arith.extui %313 : i1 to i32
    %c0_i32_89 = arith.constant 0 : i32
    %315 = arith.cmpi ne, %314, %c0_i32_89 : i32
    scf.if %315 {
      %316 = arith.truncf %311 : vector<8x32xf32> to vector<8x32xbf16>
      %c0_90 = arith.constant 0 : index
      %c0_91 = arith.constant 0 : index
      %317 = vector.load %arg7[%c0_90, %c0_91] : memref<32x128xbf16, #tpu.memory_space<vmem>>, vector<32x128xbf16>
      %cst_92 = arith.constant dense<0.000000e+00> : vector<8x128xf32>
      %318 = tpu.matmul %316, %317, %cst_92 {dimension_numbers = #tpu.dot_dimension_numbers<[1], [0], [0], [1], [0, 0, 1, 1], [], []>} : vector<8x32xbf16>, vector<32x128xbf16>, vector<8x128xf32> -> vector<8x128xf32>
      %c0_93 = arith.constant 0 : index
      %c0_94 = arith.constant 0 : index
      %319 = vector.load %arg8[%c0_93, %c0_94] : memref<1x128xf32, #tpu.memory_space<vmem>>, vector<1x128xf32>
      %320 = vector.broadcast %319 : vector<1x128xf32> to vector<8x128xf32>
      %321 = arith.addf %318, %320 : vector<8x128xf32>
      %c0_95 = arith.constant 0 : index
      %c0_96 = arith.constant 0 : index
      %322 = vector.load %arg9[%c0_95, %c0_96] : memref<8x128xf32, #tpu.memory_space<vmem>>, vector<8x128xf32>
      tpu.vector_store %arg9[%c0_95, %c0_96], %321 {strides = array<i32>} : memref<8x128xf32, #tpu.memory_space<vmem>>, vector<8x128xf32>,
    } else {
    }
    return
  }
  func.func @transform_0(%arg0: i32, %arg1: i32) -> (i32, i32, i32) {
    %c0_i32 = arith.constant 0 : i32
    %c0_i32_0 = arith.constant 0 : i32
    return %arg1, %arg0, %c0_i32 : i32, i32, i32
  }
  func.func @transform_1(%arg0: i32, %arg1: i32) -> (i32, i32, i32) {
    %c0_i32 = arith.constant 0 : i32
    %c0_i32_0 = arith.constant 0 : i32
    return %arg1, %arg0, %c0_i32 : i32, i32, i32
  }
  func.func @transform_2(%arg0: i32, %arg1: i32) -> (i32, i32, i32) {
    %c0_i32 = arith.constant 0 : i32
    %c0_i32_0 = arith.constant 0 : i32
    return %arg1, %arg0, %c0_i32 : i32, i32, i32
  }
  func.func @transform_3(%arg0: i32, %arg1: i32) -> (i32, i32) {
    %c0_i32 = arith.constant 0 : i32
    %c0_i32_0 = arith.constant 0 : i32
    %c0_i32_1 = arith.constant 0 : i32
    return %c0_i32, %c0_i32_0 : i32, i32
  }
  func.func @transform_4(%arg0: i32, %arg1: i32) -> (i32, i32) {
    %c0_i32 = arith.constant 0 : i32
    %c0_i32_0 = arith.constant 0 : i32
    %c0_i32_1 = arith.constant 0 : i32
    return %c0_i32, %c0_i32_0 : i32, i32
  }
  func.func @transform_5(%arg0: i32, %arg1: i32) -> (i32, i32) {
    %c0_i32 = arith.constant 0 : i32
    %c0_i32_0 = arith.constant 0 : i32
    %c0_i32_1 = arith.constant 0 : i32
    return %c0_i32, %c0_i32_0 : i32, i32
  }
  func.func @transform_6(%arg0: i32, %arg1: i32) -> (i32, i32) {
    %c0_i32 = arith.constant 0 : i32
    %c0_i32_0 = arith.constant 0 : i32
    %c0_i32_1 = arith.constant 0 : i32
    return %c0_i32, %c0_i32_0 : i32, i32
  }
  func.func @transform_7(%arg0: i32, %arg1: i32) -> (i32, i32) {
    %c0_i32 = arith.constant 0 : i32
    %c0_i32_0 = arith.constant 0 : i32
    return %arg0, %c0_i32 : i32, i32
  }
}

</mosaic_0001>

<llo_original>
// kernel: tpu_custom_call.1
$region0: #{tpu_custom_call.1}
  #allocation0 [shape = 'u32[]', space=smem, size = 0x4, offset = 0x4, fixed_abs, tag = 'smem constant byte address 0x4 - core index']
  #allocation1 [shape = 'u32[144,128]{1,0:T(1,128)}', space=vmem, size = 0x12000, scoped, tag = 'internal scratch']
  #allocation2 [shape = 'f32[8,32]{1,0:T(8,128)}', space=vmem, size = 0x1000, scoped, tag = 'scratch operand']
  %s0 = inlined_call_operand.hbm [shape: bf16[8,8,32], index: 0, kind: input, shape index: {}]
  %s1 = inlined_call_operand.hbm [shape: bf16[8,8,32], index: 1, kind: input, shape index: {}]
  %s2 = inlined_call_operand.hbm [shape: bf16[8,8,32], index: 2, kind: input, shape index: {}]
  %s3 = inlined_call_operand.hbm [shape: bf16[32,96], index: 3, kind: input, shape index: {}]
  %s4 = inlined_call_operand.vmem [shape: f32[1,32], index: 4, kind: input, shape index: {}]
  %s5 = inlined_call_operand.hbm [shape: bf16[32,128], index: 5, kind: input, shape index: {}]
  %s6 = inlined_call_operand.vmem [shape: f32[1,128], index: 6, kind: input, shape index: {}]
  %s7 = inlined_call_operand.hbm [shape: f32[8,128], index: 7, kind: output, shape index: {}]
  %s8 = sld [smem:[#allocation0]]
  $region66: #{tpu_custom_call.1} parent=0
    _
  %s10 = ssub.s32 1, %s8
  %s11 = scalar_select 0, %s10, %s8
  $region1: #{tpu_custom_call.1} parent=0
    #allocation3 [shape = 'u8[16384]{0}', space=vmem, size = 0x4000, scoped, tag = 'input window, operand 0, single buffered']
    #allocation4 [shape = 's32[1]{0}', space=sflag, size = 0x4, scoped, tag = 'scoped memory for tpu_custom_call.1']
    #allocation5 [shape = 's32[1]{0}', space=sflag, size = 0x4, scoped, tag = 'scoped memory for tpu_custom_call.1']
    #allocation6 [shape = 'u8[16384]{0}', space=vmem, size = 0x4000, scoped, tag = 'input window, operand 1, single buffered']
    #allocation7 [shape = 's32[1]{0}', space=sflag, size = 0x4, scoped, tag = 'scoped memory for tpu_custom_call.1']
    #allocation8 [shape = 'u8[16384]{0}', space=vmem, size = 0x4000, scoped, tag = 'input window, operand 2, single buffered']
    #allocation9 [shape = 'u8[8192]{0}', space=vmem, size = 0x2000, scoped, tag = 'input window, operand 3, single buffered']
    #allocation10 [shape = 's32[1]{0}', space=sflag, size = 0x4, scoped, tag = 'scoped memory for tpu_custom_call.1']
    #allocation11 [shape = 'u8[8192]{0}', space=vmem, size = 0x2000, scoped, tag = 'input window, operand 5, single buffered']
    #allocation12 [shape = 'u8[4096]{0}', space=vmem, size = 0x1000, scoped, tag = 'output window, operand 0, single buffered']
    %12 = vsyncpa [#allocation4], 0
    %13 = vsyncpa [#allocation7], 0
    %14 = vsyncpa [#allocation10], 0
    %15 = vsyncpa [#allocation5], 0
    // Predicated region
    $region2: #{tpu_custom_call.1} parent=1 // pred_check
      _
    $region3: #{tpu_custom_call.1} parent=1 // pred_check_branch
      %17 = sbr.rel (0) target = $region5
    $region4: #{tpu_custom_call.1} parent=1 // pred_region
      %s19 = ssub.s32 512, 512
      %20 = vsyncadd [#allocation4], %s19
      %s21 = sshll.u32 [#allocation3], 4
      %s22 = int_to_ptr.vmem [resolvable:$true] %s21
      %27 = dma.hbm_to_vmem [thread:$0]  %s0, 512, %s22, [#allocation4], 64, 64, 4
    $region5: #{tpu_custom_call.1} parent=1 // pred_fallthru
      _
    // Predicated region
    $region6: #{tpu_custom_call.1} parent=1 // pred_check
      _
    $region7: #{tpu_custom_call.1} parent=1 // pred_check_branch
      %29 = sbr.rel (0) target = $region9
    $region8: #{tpu_custom_call.1} parent=1 // pred_region
      %s31 = ssub.s32 512, 512
      %32 = vsyncadd [#allocation7], %s31
      %s33 = sshll.u32 [#allocation6], 4
      %s34 = int_to_ptr.vmem [resolvable:$true] %s33
      %39 = dma.hbm_to_vmem [thread:$0]  %s1, 512, %s34, [#allocation7], 64, 64, 4
    $region9: #{tpu_custom_call.1} parent=1 // pred_fallthru
      _
    // Predicated region
    $region10: #{tpu_custom_call.1} parent=1 // pred_check
      _
    $region11: #{tpu_custom_call.1} parent=1 // pred_check_branch
      %41 = sbr.rel (0) target = $region13
    $region12: #{tpu_custom_call.1} parent=1 // pred_region
      %s43 = ssub.s32 512, 512
      %44 = vsyncadd [#allocation7], %s43
      %s45 = sshll.u32 [#allocation8], 4
      %s46 = int_to_ptr.vmem [resolvable:$true] %s45
      %51 = dma.hbm_to_vmem [thread:$0]  %s2, 512, %s46, [#allocation7], 64, 64, 4
    $region13: #{tpu_custom_call.1} parent=1 // pred_fallthru
      _
    // Predicated region
    $region14: #{tpu_custom_call.1} parent=1 // pred_check
      _
    $region15: #{tpu_custom_call.1} parent=1 // pred_check_branch
      %53 = sbr.rel (0) target = $region17
    $region16: #{tpu_custom_call.1} parent=1 // pred_region
      %s55 = ssub.s32 256, 256
      %56 = vsyncadd [#allocation10], %s55
      %s57 = sshll.u32 [#allocation9], 4
      %s58 = int_to_ptr.vmem [resolvable:$true] %s57
      %63 = dma.hbm_to_vmem [thread:$0]  %s3, 256, %s58, [#allocation10], 64, 64, 4
    $region17: #{tpu_custom_call.1} parent=1 // pred_fallthru
      _
    // Predicated region
    $region18: #{tpu_custom_call.1} parent=1 // pred_check
      _
    $region19: #{tpu_custom_call.1} parent=1 // pred_check_branch
      %65 = sbr.rel (0) target = $region21
    $region20: #{tpu_custom_call.1} parent=1 // pred_region
      _
    $region21: #{tpu_custom_call.1} parent=1 // pred_fallthru
      _
    // Predicated region
    $region22: #{tpu_custom_call.1} parent=1 // pred_check
      _
    $region23: #{tpu_custom_call.1} parent=1 // pred_check_branch
      %67 = sbr.rel (0) target = $region25
    $region24: #{tpu_custom_call.1} parent=1 // pred_region
      %s69 = ssub.s32 256, 256
      %70 = vsyncadd [#allocation10], %s69
      %s71 = sshll.u32 [#allocation11], 4
      %s72 = int_to_ptr.vmem [resolvable:$true] %s71
      %77 = dma.hbm_to_vmem [thread:$0]  %s5, 256, %s72, [#allocation10], 64, 64, 4
    $region25: #{tpu_custom_call.1} parent=1 // pred_fallthru
      _
    // Predicated region
    $region26: #{tpu_custom_call.1} parent=1 // pred_check
      _
    $region27: #{tpu_custom_call.1} parent=1 // pred_check_branch
      %79 = sbr.rel (0) target = $region29
    $region28: #{tpu_custom_call.1} parent=1 // pred_region
      _
    $region29: #{tpu_custom_call.1} parent=1 // pred_fallthru
      _
    // Predicated region
    $region30: #{tpu_custom_call.1} parent=1 // pred_check
      _
    $region31: #{tpu_custom_call.1} parent=1 // pred_check_branch
      %81 = sbr.rel (0) target = $region33
    $region32: #{tpu_custom_call.1} parent=1 // pred_region
      %82 = dma.done [#allocation4], 512
    $region33: #{tpu_custom_call.1} parent=1 // pred_fallthru
      _
    // Predicated region
    $region34: #{tpu_custom_call.1} parent=1 // pred_check
      _
    $region35: #{tpu_custom_call.1} parent=1 // pred_check_branch
      %84 = sbr.rel (0) target = $region37
    $region36: #{tpu_custom_call.1} parent=1 // pred_region
      %85 = dma.done [#allocation7], 512
    $region37: #{tpu_custom_call.1} parent=1 // pred_fallthru
      _
    // Predicated region
    $region38: #{tpu_custom_call.1} parent=1 // pred_check
      _
    $region39: #{tpu_custom_call.1} parent=1 // pred_check_branch
      %87 = sbr.rel (0) target = $region41
    $region40: #{tpu_custom_call.1} parent=1 // pred_region
      %88 = dma.done [#allocation7], 512
    $region41: #{tpu_custom_call.1} parent=1 // pred_fallthru
      _
    // Predicated region
    $region42: #{tpu_custom_call.1} parent=1 // pred_check
      _
    $region43: #{tpu_custom_call.1} parent=1 // pred_check_branch
      %90 = sbr.rel (0) target = $region45
    $region44: #{tpu_custom_call.1} parent=1 // pred_region
      %91 = dma.done [#allocation10], 256
    $region45: #{tpu_custom_call.1} parent=1 // pred_fallthru
      _
    // Predicated region
    $region46: #{tpu_custom_call.1} parent=1 // pred_check
      _
    $region47: #{tpu_custom_call.1} parent=1 // pred_check_branch
      %93 = sbr.rel (0) target = $region49
    $region48: #{tpu_custom_call.1} parent=1 // pred_region
      %94 = dma.done [#allocation10], 256
    $region49: #{tpu_custom_call.1} parent=1 // pred_fallthru
      _
    %p96 = scmp.eq.s32.totalorder 0, 0
    // Predicated region
    $region50: #{tpu_custom_call.1} parent=1 // pred_check
      %p97 = pneg %p96
    $region51: #{tpu_custom_call.1} parent=1 // pred_check_branch
      %99 = sbr.rel (%p97) target = $region53
    $region52: #{tpu_custom_call.1} parent=1 // pred_region
      %vm100 = vcmask 261120
      %101 = vst.msk [vmem:[#allocation2] sm:$0xff] %vm100, 0.0
    $region53: #{tpu_custom_call.1} parent=1 // pred_fallthru
      _
    %v102 = vld [vmem:[#allocation9] sm:$0xf]
    %v103 = vld [vmem:[#allocation9 + $0x4] sm:$0xf]
    %v104 = vld [vmem:[#allocation9 + $0x8] sm:$0xf]
    %v105 = vld [vmem:[#allocation9 + $0xc] sm:$0xf]
    %v106 = vld [vmem:[%s4] sm:$0x1]
    %v108 = vlaneseq
    %v109 = vshrl.u32 %v108, 7
    %v110 = vsub.s32 0, %v109
    %v111 = vrot.slane %v106, %v110
    %v112 = vld [vmem:[#allocation2] sm:$0xff]
    %v113 = vpack.c.bf16 %v112, %v112
    %v118 = vunpack.c.l.b16 %v102
    %v119 = vunpack.c.l.b16 %v103
    %v120 = vunpack.c.l.b16 %v104
    %v121 = vunpack.c.l.b16 %v105
    %v122 = vpack.c.b16 %v119, %v118
    %v123 = vpack.c.b16 %v121, %v120
    %vm126 = vcmask 261120
    %v128 = vsel %vm126, %v113, 0
    %130 = vmatprep.subr.bf16.mxu0 0
    %131 = vmatpush1.bf16.msra.mxu0 0
    %132 = vmatprep.subr.bf16.mxu0 0
    %133 = vmatpush1.bf16.msra.mxu0 0
    %134 = vmatprep.subr.bf16.mxu0 0
    %135 = vmatpush1.bf16.msra.mxu0 0
    %136 = vmatprep.subr.bf16.mxu0 0
    %137 = vmatpush1.bf16.msra.mxu0 0
    %138 = vmatprep.subr.bf16.mxu0 0
    %139 = vmatpush1.bf16.msra.mxu0 0
    %140 = vmatprep.subr.bf16.mxu0 0
    %141 = vmatpush1.bf16.msra.mxu0 0
    %142 = vmatprep.subr.bf16.mxu0 0
    %143 = vmatpush1.bf16.msra.mxu0 %v123
    %144 = vmatprep.subr.bf16.mxu0 0
    %145 = vmatpush1.bf16.msra.mxu0 %v122
    %146 = vmatprep.subr.bf16.mxu0 0
    %147 = vmatpush2.bf16.msra.mxu0 0
    %148 = vmatprep.subr.bf16.mxu0 0
    %149 = vmatpush2.bf16.msra.mxu0 0
    %150 = vmatprep.subr.bf16.mxu0 0
    %151 = vmatpush2.bf16.msra.mxu0 0
    %152 = vmatprep.subr.bf16.mxu0 0
    %153 = vmatpush2.bf16.msra.mxu0 0
    %154 = vmatprep.subr.bf16.mxu0 0
    %155 = vmatpush2.bf16.msra.mxu0 0
    %156 = vmatprep.subr.bf16.mxu0 0
    %157 = vmatpush2.bf16.msra.mxu0 0
    %158 = vmatprep.subr.bf16.mxu0 0
    %159 = vmatpush2.bf16.msra.mxu0 0
    %160 = vmatprep.subr.bf16.mxu0 0
    %161 = vmatpush2.bf16.msra.mxu0 0
    %162 = vmatprep.mubr.bf16.mxu0 0
    %163 = vmatmul.mubr.bf16.gmra.mxu0 %v128
    %v164 = vpop.f32.mrf.mxu0
    %v165 = vadd.f32 0.0, %v164
    %v166 = vpop.f32.mrf.mxu0
    %v167 = vpop.f32.mrf.mxu0
    %v168 = vpop.f32.mrf.mxu0
    %169 = vdwg.mxu0
    %v170 = vld [vmem:[#allocation3] sm:$0xf]
    %v171 = vunpack.c.l.bf16 %v170
    %v172 = vadd.f32 %v171, %v165
    %v173 = vld [vmem:[#allocation6] sm:$0xf]
    %v174 = vunpack.c.l.bf16 %v173
    %176 = vrot.lane.b32.xlu0 %v165, 96
    %v177 = vpop.permute.xlu0 %176
    %v179 = vadd.f32 %v174, %v177
    %180 = vrot.lane.b32.xlu0 %v111, 64
    %v181 = vpop.permute.xlu0 %180
    %v183 = vadd.f32 %v165, %v181
    %v184 = vxor.u32 %v172, 2147483648
    %v185 = vmul.f32 %v184, 1.442695
    %v186 = vpow.pop %v185
    %v187 = vadd.f32 %v186, 1.0
    %v188 = vrcp.pop %v187
    %v189 = vmul.f32 1.0, %v188
    %v190 = vxor.u32 %v179, 2147483648
    %v191 = vmul.f32 %v190, 1.442695
    %v192 = vpow.pop %v191
    %v193 = vadd.f32 %v192, 1.0
    %v194 = vrcp.pop %v193
    %v195 = vmul.f32 1.0, %v194
    %v196 = vld [vmem:[#allocation8] sm:$0xf]
    %v197 = vunpack.c.l.bf16 %v196
    %199 = vrot.lane.b32.xlu0 %v183, 64
    %v200 = vpop.permute.xlu0 %199
    %v202 = vmul.f32 %v189, %v200
    %v203 = vadd.f32 %v197, %v202
    %v204 = vtanh.pop %v203
    %v205 = vsub.f32 1.0, %v195
    %v206 = vmul.f32 %v205, %v204
    %v207 = vmul.f32 %v195, %v112
    %v208 = vadd.f32 %v206, %v207
    %v209 = vpack.c.bf16 %v208, %v208
    %v211 = vsel %vm126, %v209, 0
    %213 = vmatprep.subr.bf16.mxu0 0
    %214 = vmatpush1.bf16.msra.mxu0 0
    %215 = vmatprep.subr.bf16.mxu0 0
    %216 = vmatpush1.bf16.msra.mxu0 0
    %217 = vmatprep.subr.bf16.mxu0 0
    %218 = vmatpush1.bf16.msra.mxu0 0
    %219 = vmatprep.subr.bf16.mxu0 0
    %220 = vmatpush1.bf16.msra.mxu0 0
    %221 = vmatprep.subr.bf16.mxu0 0
    %222 = vmatpush1.bf16.msra.mxu0 0
    %223 = vmatprep.subr.bf16.mxu0 0
    %224 = vmatpush1.bf16.msra.mxu0 0
    %225 = vmatprep.subr.bf16.mxu0 0
    %226 = vmatpush1.bf16.msra.mxu0 %v123
    %227 = vmatprep.subr.bf16.mxu0 0
    %228 = vmatpush1.bf16.msra.mxu0 %v122
    %229 = vmatprep.subr.bf16.mxu0 0
    %230 = vmatpush2.bf16.msra.mxu0 0
    %231 = vmatprep.subr.bf16.mxu0 0
    %232 = vmatpush2.bf16.msra.mxu0 0
    %233 = vmatprep.subr.bf16.mxu0 0
    %234 = vmatpush2.bf16.msra.mxu0 0
    %235 = vmatprep.subr.bf16.mxu0 0
    %236 = vmatpush2.bf16.msra.mxu0 0
    %237 = vmatprep.subr.bf16.mxu0 0
    %238 = vmatpush2.bf16.msra.mxu0 0
    %239 = vmatprep.subr.bf16.mxu0 0
    %240 = vmatpush2.bf16.msra.mxu0 0
    %241 = vmatprep.subr.bf16.mxu0 0
    %242 = vmatpush2.bf16.msra.mxu0 0
    %243 = vmatprep.subr.bf16.mxu0 0
    %244 = vmatpush2.bf16.msra.mxu0 0
    %245 = vmatprep.mubr.bf16.mxu0 0
    %246 = vmatmul.mubr.bf16.gmra.mxu0 %v211
    %v247 = vpop.f32.mrf.mxu0
    %v248 = vadd.f32 0.0, %v247
    %v249 = vpop.f32.mrf.mxu0
    %v250 = vpop.f32.mrf.mxu0
    %v251 = vpop.f32.mrf.mxu0
    %252 = vdwg.mxu0
    %s253 = scalar_lea.vmem [#allocation3], 4
    %v254 = vld [vmem:[%s253] sm:$0xf]
    %v255 = vunpack.c.l.bf16 %v254
    %v256 = vadd.f32 %v255, %v248
    %s257 = scalar_lea.vmem [#allocation6], 4
    %v258 = vld [vmem:[%s257] sm:$0xf]
    %v259 = vunpack.c.l.bf16 %v258
    %261 = vrot.lane.b32.xlu0 %v248, 96
    %v262 = vpop.permute.xlu0 %261
    %v264 = vadd.f32 %v259, %v262
    %v265 = vadd.f32 %v248, %v181
    %v266 = vxor.u32 %v256, 2147483648
    %v267 = vmul.f32 %v266, 1.442695
    %v268 = vpow.pop %v267
    %v269 = vadd.f32 %v268, 1.0
    %v270 = vrcp.pop %v269
    %v271 = vmul.f32 1.0, %v270
    %v272 = vxor.u32 %v264, 2147483648
    %v273 = vmul.f32 %v272, 1.442695
    %v274 = vpow.pop %v273
    %v275 = vadd.f32 %v274, 1.0
    %v276 = vrcp.pop %v275
    %v277 = vmul.f32 1.0, %v276
    %s278 = scalar_lea.vmem [#allocation8], 4
    %v279 = vld [vmem:[%s278] sm:$0xf]
    %v280 = vunpack.c.l.bf16 %v279
    %282 = vrot.lane.b32.xlu0 %v265, 64
    %v283 = vpop.permute.xlu0 %282
    %v285 = vmul.f32 %v271, %v283
    %v286 = vadd.f32 %v280, %v285
    %v287 = vtanh.pop %v286
    %v288 = vsub.f32 1.0, %v277
    %v289 = vmul.f32 %v288, %v287
    %v290 = vmul.f32 %v277, %v208
    %v291 = vadd.f32 %v289, %v290
    %v292 = vpack.c.bf16 %v291, %v291
    %v294 = vsel %vm126, %v292, 0
    %296 = vmatprep.subr.bf16.mxu0 0
    %297 = vmatpush1.bf16.msra.mxu0 0
    %298 = vmatprep.subr.bf16.mxu0 0
    %299 = vmatpush1.bf16.msra.mxu0 0
    %300 = vmatprep.subr.bf16.mxu0 0
    %301 = vmatpush1.bf16.msra.mxu0 0
    %302 = vmatprep.subr.bf16.mxu0 0
    %303 = vmatpush1.bf16.msra.mxu0 0
    %304 = vmatprep.subr.bf16.mxu0 0
    %305 = vmatpush1.bf16.msra.mxu0 0
    %306 = vmatprep.subr.bf16.mxu0 0
    %307 = vmatpush1.bf16.msra.mxu0 0
    %308 = vmatprep.subr.bf16.mxu0 0
    %309 = vmatpush1.bf16.msra.mxu0 %v123
    %310 = vmatprep.subr.bf16.mxu0 0
    %311 = vmatpush1.bf16.msra.mxu0 %v122
    %312 = vmatprep.subr.bf16.mxu0 0
    %313 = vmatpush2.bf16.msra.mxu0 0
    %314 = vmatprep.subr.bf16.mxu0 0
    %315 = vmatpush2.bf16.msra.mxu0 0
    %316 = vmatprep.subr.bf16.mxu0 0
    %317 = vmatpush2.bf16.msra.mxu0 0
    %318 = vmatprep.subr.bf16.mxu0 0
    %319 = vmatpush2.bf16.msra.mxu0 0
    %320 = vmatprep.subr.bf16.mxu0 0
    %321 = vmatpush2.bf16.msra.mxu0 0
    %322 = vmatprep.subr.bf16.mxu0 0
    %323 = vmatpush2.bf16.msra.mxu0 0
    %324 = vmatprep.subr.bf16.mxu0 0
    %325 = vmatpush2.bf16.msra.mxu0 0
    %326 = vmatprep.subr.bf16.mxu0 0
    %327 = vmatpush2.bf16.msra.mxu0 0
    %328 = vmatprep.mubr.bf16.mxu0 0
    %329 = vmatmul.mubr.bf16.gmra.mxu0 %v294
    %v330 = vpop.f32.mrf.mxu0
    %v331 = vadd.f32 0.0, %v330
    %v332 = vpop.f32.mrf.mxu0
    %v333 = vpop.f32.mrf.mxu0
    %v334 = vpop.f32.mrf.mxu0
    %335 = vdwg.mxu0
    %s336 = scalar_lea.vmem [#allocation3], 8
    %v337 = vld [vmem:[%s336] sm:$0xf]
    %v338 = vunpack.c.l.bf16 %v337
    %v339 = vadd.f32 %v338, %v331
    %s340 = scalar_lea.vmem [#allocation6], 8
    %v341 = vld [vmem:[%s340] sm:$0xf]
    %v342 = vunpack.c.l.bf16 %v341
    %344 = vrot.lane.b32.xlu0 %v331, 96
    %v345 = vpop.permute.xlu0 %344
    %v347 = vadd.f32 %v342, %v345
    %v348 = vadd.f32 %v331, %v181
    %v349 = vxor.u32 %v339, 2147483648
    %v350 = vmul.f32 %v349, 1.442695
    %v351 = vpow.pop %v350
    %v352 = vadd.f32 %v351, 1.0
    %v353 = vrcp.pop %v352
    %v354 = vmul.f32 1.0, %v353
    %v355 = vxor.u32 %v347, 2147483648
    %v356 = vmul.f32 %v355, 1.442695
    %v357 = vpow.pop %v356
    %v358 = vadd.f32 %v357, 1.0
    %v359 = vrcp.pop %v358
    %v360 = vmul.f32 1.0, %v359
    %s361 = scalar_lea.vmem [#allocation8], 8
    %v362 = vld [vmem:[%s361] sm:$0xf]
    %v363 = vunpack.c.l.bf16 %v362
    %365 = vrot.lane.b32.xlu0 %v348, 64
    %v366 = vpop.permute.xlu0 %365
    %v368 = vmul.f32 %v354, %v366
    %v369 = vadd.f32 %v363, %v368
    %v370 = vtanh.pop %v369
    %v371 = vsub.f32 1.0, %v360
    %v372 = vmul.f32 %v371, %v370
    %v373 = vmul.f32 %v360, %v291
    %v374 = vadd.f32 %v372, %v373
    %v375 = vpack.c.bf16 %v374, %v374
    %v377 = vsel %vm126, %v375, 0
    %379 = vmatprep.subr.bf16.mxu0 0
    %380 = vmatpush1.bf16.msra.mxu0 0
    %381 = vmatprep.subr.bf16.mxu0 0
    %382 = vmatpush1.bf16.msra.mxu0 0
    %383 = vmatprep.subr.bf16.mxu0 0
    %384 = vmatpush1.bf16.msra.mxu0 0
    %385 = vmatprep.subr.bf16.mxu0 0
    %386 = vmatpush1.bf16.msra.mxu0 0
    %387 = vmatprep.subr.bf16.mxu0 0
    %388 = vmatpush1.bf16.msra.mxu0 0
    %389 = vmatprep.subr.bf16.mxu0 0
    %390 = vmatpush1.bf16.msra.mxu0 0
    %391 = vmatprep.subr.bf16.mxu0 0
    %392 = vmatpush1.bf16.msra.mxu0 %v123
    %393 = vmatprep.subr.bf16.mxu0 0
    %394 = vmatpush1.bf16.msra.mxu0 %v122
    %395 = vmatprep.subr.bf16.mxu0 0
    %396 = vmatpush2.bf16.msra.mxu0 0
    %397 = vmatprep.subr.bf16.mxu0 0
    %398 = vmatpush2.bf16.msra.mxu0 0
    %399 = vmatprep.subr.bf16.mxu0 0
    %400 = vmatpush2.bf16.msra.mxu0 0
    %401 = vmatprep.subr.bf16.mxu0 0
    %402 = vmatpush2.bf16.msra.mxu0 0
    %403 = vmatprep.subr.bf16.mxu0 0
    %404 = vmatpush2.bf16.msra.mxu0 0
    %405 = vmatprep.subr.bf16.mxu0 0
    %406 = vmatpush2.bf16.msra.mxu0 0
    %407 = vmatprep.subr.bf16.mxu0 0
    %408 = vmatpush2.bf16.msra.mxu0 0
    %409 = vmatprep.subr.bf16.mxu0 0
    %410 = vmatpush2.bf16.msra.mxu0 0
    %411 = vmatprep.mubr.bf16.mxu0 0
    %412 = vmatmul.mubr.bf16.gmra.mxu0 %v377
    %v413 = vpop.f32.mrf.mxu0
    %v414 = vadd.f32 0.0, %v413
    %v415 = vpop.f32.mrf.mxu0
    %v416 = vpop.f32.mrf.mxu0
    %v417 = vpop.f32.mrf.mxu0
    %418 = vdwg.mxu0
    %s419 = scalar_lea.vmem [#allocation3], 12
    %v420 = vld [vmem:[%s419] sm:$0xf]
    %v421 = vunpack.c.l.bf16 %v420
    %v422 = vadd.f32 %v421, %v414
    %s423 = scalar_lea.vmem [#allocation6], 12
    %v424 = vld [vmem:[%s423] sm:$0xf]
    %v425 = vunpack.c.l.bf16 %v424
    %427 = vrot.lane.b32.xlu0 %v414, 96
    %v428 = vpop.permute.xlu0 %427
    %v430 = vadd.f32 %v425, %v428
    %v431 = vadd.f32 %v414, %v181
    %v432 = vxor.u32 %v422, 2147483648
    %v433 = vmul.f32 %v432, 1.442695
    %v434 = vpow.pop %v433
    %v435 = vadd.f32 %v434, 1.0
    %v436 = vrcp.pop %v435
    %v437 = vmul.f32 1.0, %v436
    %v438 = vxor.u32 %v430, 2147483648
    %v439 = vmul.f32 %v438, 1.442695
    %v440 = vpow.pop %v439
    %v441 = vadd.f32 %v440, 1.0
    %v442 = vrcp.pop %v441
    %v443 = vmul.f32 1.0, %v442
    %s444 = scalar_lea.vmem [#allocation8], 12
    %v445 = vld [vmem:[%s444] sm:$0xf]
    %v446 = vunpack.c.l.bf16 %v445
    %448 = vrot.lane.b32.xlu0 %v431, 64
    %v449 = vpop.permute.xlu0 %448
    %v451 = vmul.f32 %v437, %v449
    %v452 = vadd.f32 %v446, %v451
    %v453 = vtanh.pop %v452
    %v454 = vsub.f32 1.0, %v443
    %v455 = vmul.f32 %v454, %v453
    %v456 = vmul.f32 %v443, %v374
    %v457 = vadd.f32 %v455, %v456
    %v458 = vpack.c.bf16 %v457, %v457
    %v460 = vsel %vm126, %v458, 0
    %462 = vmatprep.subr.bf16.mxu0 0
    %463 = vmatpush1.bf16.msra.mxu0 0
    %464 = vmatprep.subr.bf16.mxu0 0
    %465 = vmatpush1.bf16.msra.mxu0 0
    %466 = vmatprep.subr.bf16.mxu0 0
    %467 = vmatpush1.bf16.msra.mxu0 0
    %468 = vmatprep.subr.bf16.mxu0 0
    %469 = vmatpush1.bf16.msra.mxu0 0
    %470 = vmatprep.subr.bf16.mxu0 0
    %471 = vmatpush1.bf16.msra.mxu0 0
    %472 = vmatprep.subr.bf16.mxu0 0
    %473 = vmatpush1.bf16.msra.mxu0 0
    %474 = vmatprep.subr.bf16.mxu0 0
    %475 = vmatpush1.bf16.msra.mxu0 %v123
    %476 = vmatprep.subr.bf16.mxu0 0
    %477 = vmatpush1.bf16.msra.mxu0 %v122
    %478 = vmatprep.subr.bf16.mxu0 0
    %479 = vmatpush2.bf16.msra.mxu0 0
    %480 = vmatprep.subr.bf16.mxu0 0
    %481 = vmatpush2.bf16.msra.mxu0 0
    %482 = vmatprep.subr.bf16.mxu0 0
    %483 = vmatpush2.bf16.msra.mxu0 0
    %484 = vmatprep.subr.bf16.mxu0 0
    %485 = vmatpush2.bf16.msra.mxu0 0
    %486 = vmatprep.subr.bf16.mxu0 0
    %487 = vmatpush2.bf16.msra.mxu0 0
    %488 = vmatprep.subr.bf16.mxu0 0
    %489 = vmatpush2.bf16.msra.mxu0 0
    %490 = vmatprep.subr.bf16.mxu0 0
    %491 = vmatpush2.bf16.msra.mxu0 0
    %492 = vmatprep.subr.bf16.mxu0 0
    %493 = vmatpush2.bf16.msra.mxu0 0
    %494 = vmatprep.mubr.bf16.mxu0 0
    %495 = vmatmul.mubr.bf16.gmra.mxu0 %v460
    %v496 = vpop.f32.mrf.mxu0
    %v497 = vadd.f32 0.0, %v496
    %v498 = vpop.f32.mrf.mxu0
    %v499 = vpop.f32.mrf.mxu0
    %v500 = vpop.f32.mrf.mxu0
    %501 = vdwg.mxu0
    %s502 = scalar_lea.vmem [#allocation3], 16
    %v503 = vld [vmem:[%s502] sm:$0xf]
    %v504 = vunpack.c.l.bf16 %v503
    %v505 = vadd.f32 %v504, %v497
    %s506 = scalar_lea.vmem [#allocation6], 16
    %v507 = vld [vmem:[%s506] sm:$0xf]
    %v508 = vunpack.c.l.bf16 %v507
    %510 = vrot.lane.b32.xlu0 %v497, 96
    %v511 = vpop.permute.xlu0 %510
    %v513 = vadd.f32 %v508, %v511
    %v514 = vadd.f32 %v497, %v181
    %v515 = vxor.u32 %v505, 2147483648
    %v516 = vmul.f32 %v515, 1.442695
    %v517 = vpow.pop %v516
    %v518 = vadd.f32 %v517, 1.0
    %v519 = vrcp.pop %v518
    %v520 = vmul.f32 1.0, %v519
    %v521 = vxor.u32 %v513, 2147483648
    %v522 = vmul.f32 %v521, 1.442695
    %v523 = vpow.pop %v522
    %v524 = vadd.f32 %v523, 1.0
    %v525 = vrcp.pop %v524
    %v526 = vmul.f32 1.0, %v525
    %s527 = scalar_lea.vmem [#allocation8], 16
    %v528 = vld [vmem:[%s527] sm:$0xf]
    %v529 = vunpack.c.l.bf16 %v528
    %531 = vrot.lane.b32.xlu0 %v514, 64
    %v532 = vpop.permute.xlu0 %531
    %v534 = vmul.f32 %v520, %v532
    %v535 = vadd.f32 %v529, %v534
    %v536 = vtanh.pop %v535
    %v537 = vsub.f32 1.0, %v526
    %v538 = vmul.f32 %v537, %v536
    %v539 = vmul.f32 %v526, %v457
    %v540 = vadd.f32 %v538, %v539
    %v541 = vpack.c.bf16 %v540, %v540
    %v543 = vsel %vm126, %v541, 0
    %545 = vmatprep.subr.bf16.mxu0 0
    %546 = vmatpush1.bf16.msra.mxu0 0
    %547 = vmatprep.subr.bf16.mxu0 0
    %548 = vmatpush1.bf16.msra.mxu0 0
    %549 = vmatprep.subr.bf16.mxu0 0
    %550 = vmatpush1.bf16.msra.mxu0 0
    %551 = vmatprep.subr.bf16.mxu0 0
    %552 = vmatpush1.bf16.msra.mxu0 0
    %553 = vmatprep.subr.bf16.mxu0 0
    %554 = vmatpush1.bf16.msra.mxu0 0
    %555 = vmatprep.subr.bf16.mxu0 0
    %556 = vmatpush1.bf16.msra.mxu0 0
    %557 = vmatprep.subr.bf16.mxu0 0
    %558 = vmatpush1.bf16.msra.mxu0 %v123
    %559 = vmatprep.subr.bf16.mxu0 0
    %560 = vmatpush1.bf16.msra.mxu0 %v122
    %561 = vmatprep.subr.bf16.mxu0 0
    %562 = vmatpush2.bf16.msra.mxu0 0
    %563 = vmatprep.subr.bf16.mxu0 0
    %564 = vmatpush2.bf16.msra.mxu0 0
    %565 = vmatprep.subr.bf16.mxu0 0
    %566 = vmatpush2.bf16.msra.mxu0 0
    %567 = vmatprep.subr.bf16.mxu0 0
    %568 = vmatpush2.bf16.msra.mxu0 0
    %569 = vmatprep.subr.bf16.mxu0 0
    %570 = vmatpush2.bf16.msra.mxu0 0
    %571 = vmatprep.subr.bf16.mxu0 0
    %572 = vmatpush2.bf16.msra.mxu0 0
    %573 = vmatprep.subr.bf16.mxu0 0
    %574 = vmatpush2.bf16.msra.mxu0 0
    %575 = vmatprep.subr.bf16.mxu0 0
    %576 = vmatpush2.bf16.msra.mxu0 0
    %577 = vmatprep.mubr.bf16.mxu0 0
    %578 = vmatmul.mubr.bf16.gmra.mxu0 %v543
    %v579 = vpop.f32.mrf.mxu0
    %v580 = vadd.f32 0.0, %v579
    %v581 = vpop.f32.mrf.mxu0
    %v582 = vpop.f32.mrf.mxu0
    %v583 = vpop.f32.mrf.mxu0
    %584 = vdwg.mxu0
    %s585 = scalar_lea.vmem [#allocation3], 20
    %v586 = vld [vmem:[%s585] sm:$0xf]
    %v587 = vunpack.c.l.bf16 %v586
    %v588 = vadd.f32 %v587, %v580
    %s589 = scalar_lea.vmem [#allocation6], 20
    %v590 = vld [vmem:[%s589] sm:$0xf]
    %v591 = vunpack.c.l.bf16 %v590
    %593 = vrot.lane.b32.xlu0 %v580, 96
    %v594 = vpop.permute.xlu0 %593
    %v596 = vadd.f32 %v591, %v594
    %v597 = vadd.f32 %v580, %v181
    %v598 = vxor.u32 %v588, 2147483648
    %v599 = vmul.f32 %v598, 1.442695
    %v600 = vpow.pop %v599
    %v601 = vadd.f32 %v600, 1.0
    %v602 = vrcp.pop %v601
    %v603 = vmul.f32 1.0, %v602
    %v604 = vxor.u32 %v596, 2147483648
    %v605 = vmul.f32 %v604, 1.442695
    %v606 = vpow.pop %v605
    %v607 = vadd.f32 %v606, 1.0
    %v608 = vrcp.pop %v607
    %v609 = vmul.f32 1.0, %v608
    %s610 = scalar_lea.vmem [#allocation8], 20
    %v611 = vld [vmem:[%s610] sm:$0xf]
    %v612 = vunpack.c.l.bf16 %v611
    %614 = vrot.lane.b32.xlu0 %v597, 64
    %v615 = vpop.permute.xlu0 %614
    %v617 = vmul.f32 %v603, %v615
    %v618 = vadd.f32 %v612, %v617
    %v619 = vtanh.pop %v618
    %v620 = vsub.f32 1.0, %v609
    %v621 = vmul.f32 %v620, %v619
    %v622 = vmul.f32 %v609, %v540
    %v623 = vadd.f32 %v621, %v622
    %v624 = vpack.c.bf16 %v623, %v623
    %v626 = vsel %vm126, %v624, 0
    %628 = vmatprep.subr.bf16.mxu0 0
    %629 = vmatpush1.bf16.msra.mxu0 0
    %630 = vmatprep.subr.bf16.mxu0 0
    %631 = vmatpush1.bf16.msra.mxu0 0
    %632 = vmatprep.subr.bf16.mxu0 0
    %633 = vmatpush1.bf16.msra.mxu0 0
    %634 = vmatprep.subr.bf16.mxu0 0
    %635 = vmatpush1.bf16.msra.mxu0 0
    %636 = vmatprep.subr.bf16.mxu0 0
    %637 = vmatpush1.bf16.msra.mxu0 0
    %638 = vmatprep.subr.bf16.mxu0 0
    %639 = vmatpush1.bf16.msra.mxu0 0
    %640 = vmatprep.subr.bf16.mxu0 0
    %641 = vmatpush1.bf16.msra.mxu0 %v123
    %642 = vmatprep.subr.bf16.mxu0 0
    %643 = vmatpush1.bf16.msra.mxu0 %v122
    %644 = vmatprep.subr.bf16.mxu0 0
    %645 = vmatpush2.bf16.msra.mxu0 0
    %646 = vmatprep.subr.bf16.mxu0 0
    %647 = vmatpush2.bf16.msra.mxu0 0
    %648 = vmatprep.subr.bf16.mxu0 0
    %649 = vmatpush2.bf16.msra.mxu0 0
    %650 = vmatprep.subr.bf16.mxu0 0
    %651 = vmatpush2.bf16.msra.mxu0 0
    %652 = vmatprep.subr.bf16.mxu0 0
    %653 = vmatpush2.bf16.msra.mxu0 0
    %654 = vmatprep.subr.bf16.mxu0 0
    %655 = vmatpush2.bf16.msra.mxu0 0
    %656 = vmatprep.subr.bf16.mxu0 0
    %657 = vmatpush2.bf16.msra.mxu0 0
    %658 = vmatprep.subr.bf16.mxu0 0
    %659 = vmatpush2.bf16.msra.mxu0 0
    %660 = vmatprep.mubr.bf16.mxu0 0
    %661 = vmatmul.mubr.bf16.gmra.mxu0 %v626
    %v662 = vpop.f32.mrf.mxu0
    %v663 = vadd.f32 0.0, %v662
    %v664 = vpop.f32.mrf.mxu0
    %v665 = vpop.f32.mrf.mxu0
    %v666 = vpop.f32.mrf.mxu0
    %667 = vdwg.mxu0
    %s668 = scalar_lea.vmem [#allocation3], 24
    %v669 = vld [vmem:[%s668] sm:$0xf]
    %v670 = vunpack.c.l.bf16 %v669
    %v671 = vadd.f32 %v670, %v663
    %s672 = scalar_lea.vmem [#allocation6], 24
    %v673 = vld [vmem:[%s672] sm:$0xf]
    %v674 = vunpack.c.l.bf16 %v673
    %676 = vrot.lane.b32.xlu0 %v663, 96
    %v677 = vpop.permute.xlu0 %676
    %v679 = vadd.f32 %v674, %v677
    %v680 = vadd.f32 %v663, %v181
    %v681 = vxor.u32 %v671, 2147483648
    %v682 = vmul.f32 %v681, 1.442695
    %v683 = vpow.pop %v682
    %v684 = vadd.f32 %v683, 1.0
    %v685 = vrcp.pop %v684
    %v686 = vmul.f32 1.0, %v685
    %v687 = vxor.u32 %v679, 2147483648
    %v688 = vmul.f32 %v687, 1.442695
    %v689 = vpow.pop %v688
    %v690 = vadd.f32 %v689, 1.0
    %v691 = vrcp.pop %v690
    %v692 = vmul.f32 1.0, %v691
    %s693 = scalar_lea.vmem [#allocation8], 24
    %v694 = vld [vmem:[%s693] sm:$0xf]
    %v695 = vunpack.c.l.bf16 %v694
    %697 = vrot.lane.b32.xlu0 %v680, 64
    %v698 = vpop.permute.xlu0 %697
    %v700 = vmul.f32 %v686, %v698
    %v701 = vadd.f32 %v695, %v700
    %v702 = vtanh.pop %v701
    %v703 = vsub.f32 1.0, %v692
    %v704 = vmul.f32 %v703, %v702
    %v705 = vmul.f32 %v692, %v623
    %v706 = vadd.f32 %v704, %v705
    %v707 = vpack.c.bf16 %v706, %v706
    %v709 = vsel %vm126, %v707, 0
    %711 = vmatprep.subr.bf16.mxu0 0
    %712 = vmatpush1.bf16.msra.mxu0 0
    %713 = vmatprep.subr.bf16.mxu0 0
    %714 = vmatpush1.bf16.msra.mxu0 0
    %715 = vmatprep.subr.bf16.mxu0 0
    %716 = vmatpush1.bf16.msra.mxu0 0
    %717 = vmatprep.subr.bf16.mxu0 0
    %718 = vmatpush1.bf16.msra.mxu0 0
    %719 = vmatprep.subr.bf16.mxu0 0
    %720 = vmatpush1.bf16.msra.mxu0 0
    %721 = vmatprep.subr.bf16.mxu0 0
    %722 = vmatpush1.bf16.msra.mxu0 0
    %723 = vmatprep.subr.bf16.mxu0 0
    %724 = vmatpush1.bf16.msra.mxu0 %v123
    %725 = vmatprep.subr.bf16.mxu0 0
    %726 = vmatpush1.bf16.msra.mxu0 %v122
    %727 = vmatprep.subr.bf16.mxu0 0
    %728 = vmatpush2.bf16.msra.mxu0 0
    %729 = vmatprep.subr.bf16.mxu0 0
    %730 = vmatpush2.bf16.msra.mxu0 0
    %731 = vmatprep.subr.bf16.mxu0 0
    %732 = vmatpush2.bf16.msra.mxu0 0
    %733 = vmatprep.subr.bf16.mxu0 0
    %734 = vmatpush2.bf16.msra.mxu0 0
    %735 = vmatprep.subr.bf16.mxu0 0
    %736 = vmatpush2.bf16.msra.mxu0 0
    %737 = vmatprep.subr.bf16.mxu0 0
    %738 = vmatpush2.bf16.msra.mxu0 0
    %739 = vmatprep.subr.bf16.mxu0 0
    %740 = vmatpush2.bf16.msra.mxu0 0
    %741 = vmatprep.subr.bf16.mxu0 0
    %742 = vmatpush2.bf16.msra.mxu0 0
    %743 = vmatprep.mubr.bf16.mxu0 0
    %744 = vmatmul.mubr.bf16.gmra.mxu0 %v709
    %v745 = vpop.f32.mrf.mxu0
    %v746 = vadd.f32 0.0, %v745
    %v747 = vpop.f32.mrf.mxu0
    %v748 = vpop.f32.mrf.mxu0
    %v749 = vpop.f32.mrf.mxu0
    %750 = vdwg.mxu0
    %s751 = scalar_lea.vmem [#allocation3], 28
    %v752 = vld [vmem:[%s751] sm:$0xf]
    %v753 = vunpack.c.l.bf16 %v752
    %v754 = vadd.f32 %v753, %v746
    %s755 = scalar_lea.vmem [#allocation6], 28
    %v756 = vld [vmem:[%s755] sm:$0xf]
    %v757 = vunpack.c.l.bf16 %v756
    %759 = vrot.lane.b32.xlu0 %v746, 96
    %v760 = vpop.permute.xlu0 %759
    %v762 = vadd.f32 %v757, %v760
    %v763 = vadd.f32 %v746, %v181
    %v764 = vxor.u32 %v754, 2147483648
    %v765 = vmul.f32 %v764, 1.442695
    %v766 = vpow.pop %v765
    %v767 = vadd.f32 %v766, 1.0
    %v768 = vrcp.pop %v767
    %v769 = vmul.f32 1.0, %v768
    %v770 = vxor.u32 %v762, 2147483648
    %v771 = vmul.f32 %v770, 1.442695
    %v772 = vpow.pop %v771
    %v773 = vadd.f32 %v772, 1.0
    %v774 = vrcp.pop %v773
    %v775 = vmul.f32 1.0, %v774
    %s776 = scalar_lea.vmem [#allocation8], 28
    %v777 = vld [vmem:[%s776] sm:$0xf]
    %v778 = vunpack.c.l.bf16 %v777
    %780 = vrot.lane.b32.xlu0 %v763, 64
    %v781 = vpop.permute.xlu0 %780
    %v783 = vmul.f32 %v769, %v781
    %v784 = vadd.f32 %v778, %v783
    %v785 = vtanh.pop %v784
    %v786 = vsub.f32 1.0, %v775
    %v787 = vmul.f32 %v786, %v785
    %v788 = vmul.f32 %v775, %v706
    %v789 = vadd.f32 %v787, %v788
    %790 = vst.msk [vmem:[#allocation2] sm:$0xff] %vm126, %v789
    // Predicated region
    $region54: #{tpu_custom_call.1} parent=1 // pred_check
      %p791 = pneg %p96
    $region55: #{tpu_custom_call.1} parent=1 // pred_check_branch
      %793 = sbr.rel (%p791) target = $region57
    $region56: #{tpu_custom_call.1} parent=1 // pred_region
      %v794 = vpack.c.bf16 %v789, %v789
      %v795 = vld [vmem:[#allocation11] sm:$0xf]
      %v796 = vld [vmem:[#allocation11 + $0x4] sm:$0xf]
      %v797 = vld [vmem:[#allocation11 + $0x8] sm:$0xf]
      %v798 = vld [vmem:[#allocation11 + $0xc] sm:$0xf]
      %v799 = vld [vmem:[%s6] sm:$0x1]
      %v801 = vlaneseq
      %v802 = vshrl.u32 %v801, 7
      %v803 = vsub.s32 0, %v802
      %v804 = vrot.slane %v799, %v803
      %v810 = vunpack.c.l.b16 %v795
      %v811 = vunpack.c.l.b16 %v796
      %v812 = vunpack.c.l.b16 %v797
      %v813 = vunpack.c.l.b16 %v798
      %v814 = vpack.c.b16 %v811, %v810
      %v815 = vpack.c.b16 %v813, %v812
      %v819 = vsel %vm126, %v794, 0
      %821 = vmatprep.subr.bf16.mxu0 0
      %822 = vmatpush1.bf16.msra.mxu0 0
      %823 = vmatprep.subr.bf16.mxu0 0
      %824 = vmatpush1.bf16.msra.mxu0 0
      %825 = vmatprep.subr.bf16.mxu0 0
      %826 = vmatpush1.bf16.msra.mxu0 0
      %827 = vmatprep.subr.bf16.mxu0 0
      %828 = vmatpush1.bf16.msra.mxu0 0
      %829 = vmatprep.subr.bf16.mxu0 0
      %830 = vmatpush1.bf16.msra.mxu0 0
      %831 = vmatprep.subr.bf16.mxu0 0
      %832 = vmatpush1.bf16.msra.mxu0 0
      %833 = vmatprep.subr.bf16.mxu0 0
      %834 = vmatpush1.bf16.msra.mxu0 %v815
      %835 = vmatprep.subr.bf16.mxu0 0
      %836 = vmatpush1.bf16.msra.mxu0 %v814
      %837 = vmatprep.subr.bf16.mxu0 0
      %838 = vmatpush2.bf16.msra.mxu0 0
      %839 = vmatprep.subr.bf16.mxu0 0
      %840 = vmatpush2.bf16.msra.mxu0 0
      %841 = vmatprep.subr.bf16.mxu0 0
      %842 = vmatpush2.bf16.msra.mxu0 0
      %843 = vmatprep.subr.bf16.mxu0 0
      %844 = vmatpush2.bf16.msra.mxu0 0
      %845 = vmatprep.subr.bf16.mxu0 0
      %846 = vmatpush2.bf16.msra.mxu0 0
      %847 = vmatprep.subr.bf16.mxu0 0
      %848 = vmatpush2.bf16.msra.mxu0 0
      %849 = vmatprep.subr.bf16.mxu0 0
      %850 = vmatpush2.bf16.msra.mxu0 0
      %851 = vmatprep.subr.bf16.mxu0 0
      %852 = vmatpush2.bf16.msra.mxu0 0
      %853 = vmatprep.mubr.bf16.mxu0 0
      %854 = vmatmul.mubr.bf16.gmra.mxu0 %v819
      %v855 = vpop.f32.mrf.mxu0
      %v856 = vadd.f32 %v804, %v855
      %v857 = vpop.f32.mrf.mxu0
      %v858 = vpop.f32.mrf.mxu0
      %v859 = vpop.f32.mrf.mxu0
      %860 = vdwg.mxu0
      %861 = vst [vmem:[#allocation12] sm:$0xff] %v856
    $region57: #{tpu_custom_call.1} parent=1 // pred_fallthru
      _
    // Predicated region
    $region58: #{tpu_custom_call.1} parent=1 // pred_check
      _
    $region59: #{tpu_custom_call.1} parent=1 // pred_check_branch
      %863 = sbr.rel (0) target = $region61
    $region60: #{tpu_custom_call.1} parent=1 // pred_region
      %s865 = ssub.s32 128, 128
      %866 = vsyncadd [#allocation5], %s865
      %s868 = sshll.u32 [#allocation12], 4
      %s869 = int_to_ptr.vmem [resolvable:$true] %s868
      %871 = dma.vmem_to_hbm [thread:$0]  %s869, 128, %s7, [#allocation5]
    $region61: #{tpu_custom_call.1} parent=1 // pred_fallthru
      _
    // Predicated region
    $region62: #{tpu_custom_call.1} parent=1 // pred_check
      _
    $region63: #{tpu_custom_call.1} parent=1 // pred_check_branch
      %873 = sbr.rel (0) target = $region65
    $region64: #{tpu_custom_call.1} parent=1 // pred_region
      %874 = dma.done [#allocation5], 128
    $region65: #{tpu_custom_call.1} parent=1 // pred_fallthru
      _
    %875 = vsyncpa [#allocation4], 1
    %876 = vsyncpa [#allocation7], 1
    %877 = vsyncpa [#allocation10], 1
    %878 = vsyncpa [#allocation5], 1

</llo_original>
